<compile_context>
chip_gen: v7x
topology: tpu7x:2x2x1
jax: 0.10.0
libtpu: 0.0.40
codegen_flags: <defaults>
</compile_context>

<pallas_src>
import functools

import jax
import jax.numpy as jnp
from jax.experimental import pallas as pl
from jax.experimental.pallas import tpu as pltpu


def _convt_phase_kernel(x_ref, w_ref, b_ref, y_ref, st_ref, *,
                        s, kt, cin, cout, thb, wb, off_h, off_w):
    """One (sample, row-tile) step of the sub-pixel ConvTranspose2d.

    x_ref : (HP, WP, CIN)            bf16 whole padded sample (resident per sample)
    w_ref : (s*s*kt*kt, CIN, COUT)   bf16 zero-free per-phase / per-tap weights
    b_ref : (1, COUT)                f32 bias
    y_ref : (1, s*s, thb, wb, COUT)  bf16 conv output, phase-blocked layout
    st_ref: (1, 1, 2, COUT)          f32 per-tile per-channel [sum, sumsq]
    """
    t = pl.program_id(1)
    row0 = t * thb
    bias = b_ref[...]                                          # (1, cout) f32

    s_col = jnp.zeros((1, cout), jnp.float32)
    ss_col = jnp.zeros((1, cout), jnp.float32)
    blocks = []
    for ph in range(s):
        for pw in range(s):
            p_idx = ph * s + pw
            acc = jnp.zeros((thb * wb, cout), jnp.float32)
            # in-VMEM im2col: kt*kt shifted windows feed the MXU directly.
            for a in range(kt):
                for bb in range(kt):
                    c0 = off_w[pw] + bb
                    slab = x_ref[pl.ds(row0 + off_h[ph] + a, thb),
                                 c0:c0 + wb, :]                 # (thb, wb, cin) bf16
                    acc = acc + jnp.dot(
                        slab.reshape(thb * wb, cin),
                        w_ref[p_idx * (kt * kt) + a * kt + bb],
                        preferred_element_type=jnp.float32)
            acc = acc + bias
            y_bf = acc.astype(jnp.bfloat16)                     # stored values
            yf = y_bf.astype(jnp.float32)                       # stats from stored vals
            s_col = s_col + jnp.sum(yf, axis=0, keepdims=True)
            ss_col = ss_col + jnp.sum(yf * yf, axis=0, keepdims=True)
            blocks.append(y_bf.reshape(thb, wb, cout))

    y_ref[0] = jnp.stack(blocks, axis=0)                        # (s*s, thb, wb, cout)
    st = jnp.concatenate([s_col, ss_col], axis=0)               # (2, cout)
    st_ref[...] = st.reshape(1, 1, 2, cout)


def _groupnorm_swish_kernel(y_ref, st_ref, mask_ref, par_ref, o_ref, *,
                            inv_count, eps):
    """Normalize + affine + Swish for one (sample, row-tile) step.

    y_ref   : (1, s*s, thb, wb, COUT) bf16 conv output tile
    st_ref  : (1, n_tiles, 2, COUT)   f32 per-tile [sum, sumsq] for this sample
    mask_ref: (G, COUT)               f32 0/1 channel -> group membership
    par_ref : (2, COUT)               f32 [gamma; beta]
    o_ref   : (1, s*s, thb, wb, COUT) output tile
    """
    st = jnp.sum(st_ref[0], axis=0)                             # (2, cout), whole sample
    col_sum = st[0:1, :]
    col_ssq = st[1:2, :]
    mask = mask_ref[...]                                        # (G, cout)
    g_mean = jnp.sum(col_sum * mask, axis=1, keepdims=True) * inv_count   # (G, 1)
    g_msq = jnp.sum(col_ssq * mask, axis=1, keepdims=True) * inv_count
    g_var = jnp.maximum(g_msq - g_mean * g_mean, 0.0)           # clamp cancellation
    g_inv = jax.lax.rsqrt(g_var + eps)
    mean_c = jnp.sum(g_mean * mask, axis=0, keepdims=True)      # (1, cout)
    inv_c = jnp.sum(g_inv * mask, axis=0, keepdims=True)
    par = par_ref[...]
    gamma = par[0:1, :]
    beta = par[1:2, :]
    scale = inv_c * gamma
    shift = beta - mean_c * scale
    z = y_ref[0].astype(jnp.float32) * scale + shift            # (s*s, thb, wb, cout)
    o_ref[0] = (z * jax.nn.sigmoid(z)).astype(o_ref.dtype)


def upsample_convt(x_nchw, w_pt, b, gamma, beta, *, stride, padding,
                   num_groups=16, eps=1e-6, row_block=None,
                   out_dtype=jnp.bfloat16):
    """ConvTranspose2d(stride, padding) -> GroupNorm(num_groups, eps) -> Swish.

    NCHW in / NCHW out (PyTorch layout).  MXU operands and HBM-resident
    activations are bf16; accumulation and GroupNorm statistics are f32.
    """
    n, cin, h, w = x_nchw.shape
    cin_w, cout, kh_dim, kw_dim = w_pt.shape
    assert cin == cin_w and kh_dim == kw_dim
    k, s = kh_dim, stride
    assert cout % num_groups == 0
    cpg = cout // num_groups
    # TODO(synk): support kernel_size % stride != 0 (pad per-phase tap counts).
    assert k % s == 0, "zero-free phase decomposition needs stride | kernel_size"
    kt = k // s
    hout = (h - 1) * s - 2 * padding + k
    wout = (w - 1) * s - 2 * padding + k
    assert hout > 0 and wout > 0 and hout % s == 0 and wout % s == 0
    hb, wb = hout // s, wout // s

    # Sub-pixel phase geometry: output row i*s+ph uses input rows i+base(ph)+a,
    # a in [0, kt), with ConvT kernel row kh = r0(ph) + (kt-1-a)*s.
    r0s, bases = [], []
    for ph in range(s):
        r0s.append((ph + padding) % s)
        bases.append((ph + padding) // s - (kt - 1))
    pad_lo = max(0, -min(bases))
    pad_hi_h = max(0, (hb - 1) + max(bases) + (kt - 1) - (h - 1))
    pad_hi_w = max(0, (wb - 1) + max(bases) + (kt - 1) - (w - 1))
    off = tuple(bi + pad_lo for bi in bases)        # per-phase window start (padded)

    # Padded bf16 NHWC input (small; stays resident in VMEM once per sample).
    x_nhwc = jnp.transpose(x_nchw, (0, 2, 3, 1)).astype(jnp.float32)
    xp = jnp.pad(x_nhwc.astype(jnp.bfloat16),
                 ((0, 0), (pad_lo, pad_hi_h), (pad_lo, pad_hi_w), (0, 0)))
    hp = h + pad_lo + pad_hi_h
    wpad = w + pad_lo + pad_hi_w

    # Zero-free per-phase / per-tap weights: (s*s*kt*kt, cin, cout).
    w_kkio = jnp.transpose(w_pt, (2, 3, 0, 1)).astype(jnp.float32)   # (k, k, cin, cout)
    taps = []
    for ph in range(s):
        for pw in range(s):
            for a in range(kt):
                kh_i = r0s[ph] + (kt - 1 - a) * s
                for bb in range(kt):
                    kw_i = r0s[pw] + (kt - 1 - bb) * s
                    taps.append(w_kkio[kh_i, kw_i])                  # (cin, cout)
    w_all = jnp.stack(taps, axis=0).astype(jnp.bfloat16)

    b2 = b.astype(jnp.float32).reshape(1, cout)
    par = jnp.stack([gamma.astype(jnp.float32), beta.astype(jnp.float32)], axis=0)
    grp = jnp.arange(cout, dtype=jnp.int32) // cpg
    mask = (grp[None, :] == jnp.arange(num_groups, dtype=jnp.int32)[:, None]
            ).astype(jnp.float32)                                    # (G, cout)

    # Row-tile size: largest divisor of hb keeping the per-step output tile modest.
    if row_block is None:
        row_block = 1
        for d in range(1, hb + 1):
            if hb % d == 0 and d * wb <= 2048 and \
                    d * wb * s * s * cout * 2 <= (4 << 20):
                row_block = d
    assert hb % row_block == 0
    thb = row_block
    n_tiles = hb // thb

    # Explicit scoped-VMEM limit (defaults are 16-32 MiB; keep <= v7x physical).
    est = (2 * hp * wpad * cin * 2                     # resident input (2 buffers)
           + s * s * kt * kt * cin * cout * 2          # weights
           + 2 * s * s * thb * wb * cout * 2           # y tile (double buffered)
           + thb * wb * (6 * cout * 4 + cin * 2)       # working values
           + (1 << 20))
    vmem_limit = int(min(56 << 20, max(32 << 20, 2 * est)))

    kern_a = functools.partial(
        _convt_phase_kernel, s=s, kt=kt, cin=cin, cout=cout,
        thb=thb, wb=wb, off_h=off, off_w=off)
    y, stats = pl.pallas_call(
        kern_a,
        out_shape=(
            jax.ShapeDtypeStruct((n, s * s, hb, wb, cout), jnp.bfloat16),
            jax.ShapeDtypeStruct((n, n_tiles, 2, cout), jnp.float32)),
        grid_spec=pltpu.PrefetchScalarGridSpec(
            num_scalar_prefetch=0,
            grid=(n, n_tiles),
            in_specs=[
                pl.BlockSpec((None, hp, wpad, cin), lambda i, t: (i, 0, 0, 0)),
                pl.BlockSpec((s * s * kt * kt, cin, cout), lambda i, t: (0, 0, 0)),
                pl.BlockSpec((1, cout), lambda i, t: (0, 0)),
            ],
            out_specs=(
                pl.BlockSpec((1, s * s, thb, wb, cout), lambda i, t: (i, 0, t, 0, 0)),
                pl.BlockSpec((1, 1, 2, cout), lambda i, t: (i, t, 0, 0)),
            ),
        ),
        compiler_params=pltpu.CompilerParams(
            dimension_semantics=("parallel", "parallel"),
            vmem_limit_bytes=vmem_limit),
    )(xp, w_all, b2)

    kern_b = functools.partial(
        _groupnorm_swish_kernel,
        inv_count=1.0 / float(hout * wout * cpg), eps=float(eps))
    out = pl.pallas_call(
        kern_b,
        out_shape=jax.ShapeDtypeStruct((n, s * s, hb, wb, cout), out_dtype),
        grid_spec=pltpu.PrefetchScalarGridSpec(
            num_scalar_prefetch=0,
            grid=(n, n_tiles),
            in_specs=[
                pl.BlockSpec((1, s * s, thb, wb, cout), lambda i, t: (i, 0, t, 0, 0)),
                pl.BlockSpec((1, n_tiles, 2, cout), lambda i, t: (i, 0, 0, 0)),
                pl.BlockSpec((num_groups, cout), lambda i, t: (0, 0)),
                pl.BlockSpec((2, cout), lambda i, t: (0, 0)),
            ],
            out_specs=pl.BlockSpec((1, s * s, thb, wb, cout),
                                   lambda i, t: (i, 0, t, 0, 0)),
        ),
        compiler_params=pltpu.CompilerParams(
            dimension_semantics=("parallel", "parallel"),
            vmem_limit_bytes=vmem_limit),
    )(y, stats, mask, par)

    # Phase un-shuffle folded into the single (mandatory) NCHW transpose:
    # (n, ph, pw, i, j, c) -> (n, c, i, ph, j, pw) -> (n, c, hout, wout).
    out = out.reshape(n, s, s, hb, wb, cout)
    out = jnp.transpose(out, (0, 5, 3, 1, 4, 2)).reshape(n, cout, hout, wout)
    return out


def _reference(x_nchw, w_pt, b, gamma, beta, *, stride, padding,
               num_groups=16, eps=1e-6):
    """Pure-JAX reference (lhs-dilated conv).  Mirrors the kernel's bf16 rounding
    of the matmul operands and of the HBM-resident conv intermediate so the
    comparison isolates indexing / normalization correctness."""
    x = jnp.transpose(x_nchw, (0, 2, 3, 1)).astype(jnp.float32)
    k = w_pt.shape[2]
    pe = k - 1 - padding
    w_hwio = jnp.transpose(w_pt[:, :, ::-1, ::-1], (2, 3, 0, 1)).astype(jnp.float32)
    xq = x.astype(jnp.bfloat16).astype(jnp.float32)
    wq = w_hwio.astype(jnp.bfloat16).astype(jnp.float32)
    y = jax.lax.conv_general_dilated(
        xq, wq, window_strides=(1, 1),
        padding=[(pe, pe), (pe, pe)], lhs_dilation=(stride, stride),
        dimension_numbers=('NHWC', 'HWIO', 'NHWC'),
        precision=jax.lax.Precision.HIGHEST) + b
    y = y.astype(jnp.bfloat16).astype(jnp.float32)    # mirror bf16 intermediate
    n_, hh, ww, cc = y.shape
    yg = y.reshape(n_, hh, ww, num_groups, cc // num_groups)
    mean = yg.mean(axis=(1, 2, 4), keepdims=True)
    var = yg.var(axis=(1, 2, 4), keepdims=True)
    yn = ((yg - mean) / jnp.sqrt(var + eps)).reshape(n_, hh, ww, cc)
    yn = yn * gamma + beta
    z = yn * jax.nn.sigmoid(yn)
    return jnp.transpose(z, (0, 3, 1, 2))


if __name__ == "__main__":
    # Small shapes consistent with the module: 2x upsample 8x8 -> 16x16.
    N, CIN, COUT, H, W = 2, 8, 32, 8, 8
    K, STRIDE, PAD = 4, 2, 1  # classic 2x-upsample ConvTranspose config

    key = jax.random.PRNGKey(0)
    kx, kw_, kb, kg, kbe = jax.random.split(key, 5)
    x = jax.random.normal(kx, (N, CIN, H, W), jnp.float32)
    w_pt = 0.1 * jax.random.normal(kw_, (CIN, COUT, K, K), jnp.float32)  # PyTorch ConvT layout
    b = 0.1 * jax.random.normal(kb, (COUT,), jnp.float32)
    gamma = 1.0 + 0.1 * jax.random.normal(kg, (COUT,), jnp.float32)
    beta = 0.1 * jax.random.normal(kbe, (COUT,), jnp.float32)

    fwd = jax.jit(functools.partial(upsample_convt, stride=STRIDE, padding=PAD,
                                    row_block=2))    # 4 row tiles -> exercises tiling
    out = jax.block_until_ready(fwd(x, w_pt, b, gamma, beta))

    HOUT = (H - 1) * STRIDE - 2 * PAD + K
    WOUT = (W - 1) * STRIDE - 2 * PAD + K
    assert out.shape == (N, COUT, HOUT, WOUT)

    ref = _reference(x, w_pt, b, gamma, beta, stride=STRIDE, padding=PAD)
    out32 = out.astype(jnp.float32)
    err = float(jnp.max(jnp.abs(out32 - ref)))
    # bf16 activations / bf16 output on the kernel path -> ~1e-2 scale agreement.
    assert jnp.allclose(out32, ref, atol=2e-2, rtol=2e-2), f"max abs diff {err}"
    print("KERNEL_OK")
</pallas_src>

<mosaic_0001>
module attributes {stable_mosaic.version = 11 : i64} {
  func.func @_groupnorm_swish_kernel(%arg0: i32, %arg1: i32, %arg2: memref<1x4x2x8x32xbf16, #tpu.memory_space<vmem>>, %arg3: memref<1x4x2x32xf32, #tpu.memory_space<vmem>>, %arg4: memref<16x32xf32, #tpu.memory_space<vmem>>, %arg5: memref<2x32xf32, #tpu.memory_space<vmem>>, %arg6: memref<1x4x2x8x32xbf16, #tpu.memory_space<vmem>>) attributes {dimension_semantics = [#tpu.dimension_semantics<parallel>, #tpu.dimension_semantics<parallel>], iteration_bounds = array<i64: 2, 4>, scalar_prefetch = 0 : i64, scratch_operands = 0 : i64, tpu.core_type = #tpu.core_type<tc>, window_params = [{transform_indices = @transform_0, window_bounds = array<i64: 1, 4, 2, 8, 32>}, {transform_indices = @transform_1, window_bounds = array<i64: 1, 4, 2, 32>}, {pipeline_mode = #tpu.pipeline_mode<synchronous>, transform_indices = @transform_2, window_bounds = array<i64: 16, 32>}, {pipeline_mode = #tpu.pipeline_mode<synchronous>, transform_indices = @transform_3, window_bounds = array<i64: 2, 32>}, {transform_indices = @transform_4, window_bounds = array<i64: 1, 4, 2, 8, 32>}]} {
    %c0 = arith.constant 0 : index
    %c0_0 = arith.constant 0 : index
    %c0_1 = arith.constant 0 : index
    %c0_2 = arith.constant 0 : index
    %0 = vector.load %arg3[%c0, %c0_0, %c0_1, %c0_2] : memref<1x4x2x32xf32, #tpu.memory_space<vmem>>, vector<1x4x2x32xf32>
    %1 = vector.shape_cast %0 : vector<1x4x2x32xf32> to vector<4x2x32xf32>
    %cst = arith.constant dense<0.000000e+00> : vector<2x32xf32>
    %2 = vector.multi_reduction <add>, %1, %cst [0] : vector<4x2x32xf32> to vector<2x32xf32>
    %3 = vector.extract_strided_slice %2 {offsets = [0, 0], sizes = [1, 32], strides = [1, 1]} : vector<2x32xf32> to vector<1x32xf32>
    %4 = vector.extract_strided_slice %2 {offsets = [1, 0], sizes = [1, 32], strides = [1, 1]} : vector<2x32xf32> to vector<1x32xf32>
    %c0_3 = arith.constant 0 : index
    %c0_4 = arith.constant 0 : index
    %5 = vector.load %arg4[%c0_3, %c0_4] : memref<16x32xf32, #tpu.memory_space<vmem>>, vector<16x32xf32>
    %6 = vector.broadcast %3 : vector<1x32xf32> to vector<16x32xf32>
    %7 = arith.mulf %6, %5 : vector<16x32xf32>
    %cst_5 = arith.constant dense<0.000000e+00> : vector<16xf32>
    %8 = vector.multi_reduction <add>, %7, %cst_5 [1] : vector<16x32xf32> to vector<16xf32>
    %9 = vector.shape_cast %8 : vector<16xf32> to vector<16x1xf32>
    %cst_6 = arith.constant 0.001953125 : f32
    %10 = vector.broadcast %cst_6 : f32 to vector<16x1xf32>
    %11 = arith.mulf %9, %10 : vector<16x1xf32>
    %12 = vector.broadcast %4 : vector<1x32xf32> to vector<16x32xf32>
    %13 = arith.mulf %12, %5 : vector<16x32xf32>
    %cst_7 = arith.constant dense<0.000000e+00> : vector<16xf32>
    %14 = vector.multi_reduction <add>, %13, %cst_7 [1] : vector<16x32xf32> to vector<16xf32>
    %15 = vector.shape_cast %14 : vector<16xf32> to vector<16x1xf32>
    %cst_8 = arith.constant 0.001953125 : f32
    %16 = vector.broadcast %cst_8 : f32 to vector<16x1xf32>
    %17 = arith.mulf %15, %16 : vector<16x1xf32>
    %18 = arith.mulf %11, %11 : vector<16x1xf32>
    %19 = arith.subf %17, %18 : vector<16x1xf32>
    %cst_9 = arith.constant 0.000000e+00 : f32
    %20 = vector.broadcast %cst_9 : f32 to vector<16x1xf32>
    %21 = arith.maximumf %19, %20 : vector<16x1xf32>
    %cst_10 = arith.constant 9.99999997E-7 : f32
    %22 = vector.broadcast %cst_10 : f32 to vector<16x1xf32>
    %23 = arith.addf %21, %22 : vector<16x1xf32>
    %24 = math.rsqrt %23 : vector<16x1xf32>
    %25 = vector.broadcast %11 : vector<16x1xf32> to vector<16x32xf32>
    %26 = arith.mulf %25, %5 : vector<16x32xf32>
    %cst_11 = arith.constant dense<0.000000e+00> : vector<32xf32>
    %27 = vector.multi_reduction <add>, %26, %cst_11 [0] : vector<16x32xf32> to vector<32xf32>
    %28 = vector.shape_cast %27 : vector<32xf32> to vector<1x32xf32>
    %29 = vector.broadcast %24 : vector<16x1xf32> to vector<16x32xf32>
    %30 = arith.mulf %29, %5 : vector<16x32xf32>
    %cst_12 = arith.constant dense<0.000000e+00> : vector<32xf32>
    %31 = vector.multi_reduction <add>, %30, %cst_12 [0] : vector<16x32xf32> to vector<32xf32>
    %32 = vector.shape_cast %31 : vector<32xf32> to vector<1x32xf32>
    %c0_13 = arith.constant 0 : index
    %c0_14 = arith.constant 0 : index
    %33 = vector.load %arg5[%c0_13, %c0_14] : memref<2x32xf32, #tpu.memory_space<vmem>>, vector<2x32xf32>
    %34 = vector.extract_strided_slice %33 {offsets = [0, 0], sizes = [1, 32], strides = [1, 1]} : vector<2x32xf32> to vector<1x32xf32>
    %35 = vector.extract_strided_slice %33 {offsets = [1, 0], sizes = [1, 32], strides = [1, 1]} : vector<2x32xf32> to vector<1x32xf32>
    %36 = arith.mulf %32, %34 : vector<1x32xf32>
    %37 = arith.mulf %28, %36 : vector<1x32xf32>
    %38 = arith.subf %35, %37 : vector<1x32xf32>
    %c0_15 = arith.constant 0 : index
    %c0_16 = arith.constant 0 : index
    %c0_17 = arith.constant 0 : index
    %c0_18 = arith.constant 0 : index
    %c0_19 = arith.constant 0 : index
    %39 = vector.load %arg2[%c0_15, %c0_16, %c0_17, %c0_18, %c0_19] : memref<1x4x2x8x32xbf16, #tpu.memory_space<vmem>>, vector<1x4x2x8x32xbf16>
    %40 = vector.shape_cast %39 : vector<1x4x2x8x32xbf16> to vector<4x2x8x32xbf16>
    %41 = arith.extf %40 : vector<4x2x8x32xbf16> to vector<4x2x8x32xf32>
    %42 = vector.shape_cast %36 : vector<1x32xf32> to vector<1x1x1x32xf32>
    %43 = vector.broadcast %42 : vector<1x1x1x32xf32> to vector<4x2x8x32xf32>
    %44 = arith.mulf %41, %43 : vector<4x2x8x32xf32>
    %45 = vector.shape_cast %38 : vector<1x32xf32> to vector<1x1x1x32xf32>
    %46 = vector.broadcast %45 : vector<1x1x1x32xf32> to vector<4x2x8x32xf32>
    %47 = arith.addf %44, %46 : vector<4x2x8x32xf32>
    %48 = arith.negf %47 : vector<4x2x8x32xf32>
    %49 = math.exp %48 : vector<4x2x8x32xf32>
    %cst_20 = arith.constant 1.000000e+00 : f32
    %50 = vector.broadcast %cst_20 : f32 to vector<4x2x8x32xf32>
    %51 = arith.addf %50, %49 : vector<4x2x8x32xf32>
    %52 = arith.divf %50, %51 : vector<4x2x8x32xf32>
    %53 = arith.mulf %47, %52 : vector<4x2x8x32xf32>
    %54 = arith.truncf %53 : vector<4x2x8x32xf32> to vector<4x2x8x32xbf16>
    %c0_21 = arith.constant 0 : index
    %c0_22 = arith.constant 0 : index
    %c0_23 = arith.constant 0 : index
    %c0_24 = arith.constant 0 : index
    %c0_25 = arith.constant 0 : index
    %55 = vector.load %arg6[%c0_21, %c0_22, %c0_23, %c0_24, %c0_25] : memref<1x4x2x8x32xbf16, #tpu.memory_space<vmem>>, vector<1x4x2x8x32xbf16>
    %56 = vector.shape_cast %55 : vector<1x4x2x8x32xbf16> to vector<4x2x8x32xbf16>
    %57 = vector.shape_cast %54 : vector<4x2x8x32xbf16> to vector<1x4x2x8x32xbf16>
    tpu.vector_store %arg6[%c0_21, %c0_22, %c0_23, %c0_24, %c0_25], %57 {strides = array<i32>} : memref<1x4x2x8x32xbf16, #tpu.memory_space<vmem>>, vector<1x4x2x8x32xbf16>,
    return
  }
  func.func @transform_0(%arg0: i32, %arg1: i32) -> (i32, i32, i32, i32, i32) {
    %c0_i32 = arith.constant 0 : i32
    %c0_i32_0 = arith.constant 0 : i32
    %c0_i32_1 = arith.constant 0 : i32
    %c0_i32_2 = arith.constant 0 : i32
    return %arg0, %c0_i32, %arg1, %c0_i32_0, %c0_i32_1 : i32, i32, i32, i32, i32
  }
  func.func @transform_1(%arg0: i32, %arg1: i32) -> (i32, i32, i32, i32) {
    %c0_i32 = arith.constant 0 : i32
    %c0_i32_0 = arith.constant 0 : i32
    %c0_i32_1 = arith.constant 0 : i32
    %c0_i32_2 = arith.constant 0 : i32
    return %arg0, %c0_i32, %c0_i32_0, %c0_i32_1 : i32, i32, i32, i32
  }
  func.func @transform_2(%arg0: i32, %arg1: i32) -> (i32, i32) {
    %c0_i32 = arith.constant 0 : i32
    %c0_i32_0 = arith.constant 0 : i32
    %c0_i32_1 = arith.constant 0 : i32
    return %c0_i32, %c0_i32_0 : i32, i32
  }
  func.func @transform_3(%arg0: i32, %arg1: i32) -> (i32, i32) {
    %c0_i32 = arith.constant 0 : i32
    %c0_i32_0 = arith.constant 0 : i32
    %c0_i32_1 = arith.constant 0 : i32
    return %c0_i32, %c0_i32_0 : i32, i32
  }
  func.func @transform_4(%arg0: i32, %arg1: i32) -> (i32, i32, i32, i32, i32) {
    %c0_i32 = arith.constant 0 : i32
    %c0_i32_0 = arith.constant 0 : i32
    %c0_i32_1 = arith.constant 0 : i32
    %c0_i32_2 = arith.constant 0 : i32
    return %arg0, %c0_i32, %arg1, %c0_i32_0, %c0_i32_1 : i32, i32, i32, i32, i32
  }
}

module attributes {stable_mosaic.version = 11 : i64} {
  func.func @_convt_phase_kernel(%arg0: i32, %arg1: i32, %arg2: memref<1x10x10x8xbf16, #tpu.memory_space<vmem>>, %arg3: memref<16x8x32xbf16, #tpu.memory_space<vmem>>, %arg4: memref<1x32xf32, #tpu.memory_space<vmem>>, %arg5: memref<1x4x2x8x32xbf16, #tpu.memory_space<vmem>>, %arg6: memref<1x1x2x32xf32, #tpu.memory_space<vmem>>) attributes {dimension_semantics = [#tpu.dimension_semantics<parallel>, #tpu.dimension_semantics<parallel>], iteration_bounds = array<i64: 2, 4>, scalar_prefetch = 0 : i64, scratch_operands = 0 : i64, tpu.core_type = #tpu.core_type<tc>, window_params = [{transform_indices = @transform_0, window_bounds = array<i64: 1, 10, 10, 8>}, {pipeline_mode = #tpu.pipeline_mode<synchronous>, transform_indices = @transform_1, window_bounds = array<i64: 16, 8, 32>}, {pipeline_mode = #tpu.pipeline_mode<synchronous>, transform_indices = @transform_2, window_bounds = array<i64: 1, 32>}, {transform_indices = @transform_3, window_bounds = array<i64: 1, 4, 2, 8, 32>}, {transform_indices = @transform_4, window_bounds = array<i64: 1, 1, 2, 32>}]} {
    %c2_i32 = arith.constant 2 : i32
    %0 = arith.muli %arg1, %c2_i32 : i32
    %c0 = arith.constant 0 : index
    %c0_0 = arith.constant 0 : index
    %1 = vector.load %arg4[%c0, %c0_0] : memref<1x32xf32, #tpu.memory_space<vmem>>, vector<1x32xf32>
    %cst = arith.constant 0.000000e+00 : f32
    %2 = vector.broadcast %cst : f32 to vector<1x32xf32>
    %cst_1 = arith.constant 0.000000e+00 : f32
    %3 = vector.broadcast %cst_1 : f32 to vector<1x32xf32>
    %cst_2 = arith.constant 0.000000e+00 : f32
    %4 = vector.broadcast %cst_2 : f32 to vector<16x32xf32>
    %c0_i32 = arith.constant 0 : i32
    %5 = arith.addi %0, %c0_i32 : i32
    %c0_i32_3 = arith.constant 0 : i32
    %6 = arith.addi %5, %c0_i32_3 : i32
    %c0_4 = arith.constant 0 : index
    %7 = arith.index_cast %6 : i32 to index
    %c0_5 = arith.constant 0 : index
    %c0_6 = arith.constant 0 : index
    %8 = vector.load %arg2[%c0_4, %7, %c0_5, %c0_6] : memref<1x10x10x8xbf16, #tpu.memory_space<vmem>>, vector<1x2x8x8xbf16>
    %9 = vector.shape_cast %8 : vector<1x2x8x8xbf16> to vector<2x8x8xbf16>
    %10 = vector.shape_cast %9 : vector<2x8x8xbf16> to vector<16x8xbf16>
    %c0_7 = arith.constant 0 : index
    %c0_8 = arith.constant 0 : index
    %c0_9 = arith.constant 0 : index
    %11 = vector.load %arg3[%c0_7, %c0_8, %c0_9] : memref<16x8x32xbf16, #tpu.memory_space<vmem>>, vector<1x8x32xbf16>
    %12 = vector.shape_cast %11 : vector<1x8x32xbf16> to vector<8x32xbf16>
    %cst_10 = arith.constant dense<0.000000e+00> : vector<16x32xf32>
    %13 = tpu.matmul %10, %12, %cst_10 {dimension_numbers = #tpu.dot_dimension_numbers<[1], [0], [0], [1], [0, 0, 1, 1], [], []>} : vector<16x8xbf16>, vector<8x32xbf16>, vector<16x32xf32> -> vector<16x32xf32>
    %14 = arith.addf %4, %13 : vector<16x32xf32>
    %c0_i32_11 = arith.constant 0 : i32
    %15 = arith.addi %0, %c0_i32_11 : i32
    %c0_i32_12 = arith.constant 0 : i32
    %16 = arith.addi %15, %c0_i32_12 : i32
    %c0_13 = arith.constant 0 : index
    %17 = arith.index_cast %16 : i32 to index
    %c1 = arith.constant 1 : index
    %c0_14 = arith.constant 0 : index
    %18 = vector.load %arg2[%c0_13, %17, %c1, %c0_14] : memref<1x10x10x8xbf16, #tpu.memory_space<vmem>>, vector<1x2x8x8xbf16>
    %19 = vector.shape_cast %18 : vector<1x2x8x8xbf16> to vector<2x8x8xbf16>
    %20 = vector.shape_cast %19 : vector<2x8x8xbf16> to vector<16x8xbf16>
    %c1_15 = arith.constant 1 : index
    %c0_16 = arith.constant 0 : index
    %c0_17 = arith.constant 0 : index
    %21 = vector.load %arg3[%c1_15, %c0_16, %c0_17] : memref<16x8x32xbf16, #tpu.memory_space<vmem>>, vector<1x8x32xbf16>
    %22 = vector.shape_cast %21 : vector<1x8x32xbf16> to vector<8x32xbf16>
    %cst_18 = arith.constant dense<0.000000e+00> : vector<16x32xf32>
    %23 = tpu.matmul %20, %22, %cst_18 {dimension_numbers = #tpu.dot_dimension_numbers<[1], [0], [0], [1], [0, 0, 1, 1], [], []>} : vector<16x8xbf16>, vector<8x32xbf16>, vector<16x32xf32> -> vector<16x32xf32>
    %24 = arith.addf %14, %23 : vector<16x32xf32>
    %c0_i32_19 = arith.constant 0 : i32
    %25 = arith.addi %0, %c0_i32_19 : i32
    %c1_i32 = arith.constant 1 : i32
    %26 = arith.addi %25, %c1_i32 : i32
    %c0_20 = arith.constant 0 : index
    %27 = arith.index_cast %26 : i32 to index
    %c0_21 = arith.constant 0 : index
    %c0_22 = arith.constant 0 : index
    %28 = vector.load %arg2[%c0_20, %27, %c0_21, %c0_22] : memref<1x10x10x8xbf16, #tpu.memory_space<vmem>>, vector<1x2x8x8xbf16>
    %29 = vector.shape_cast %28 : vector<1x2x8x8xbf16> to vector<2x8x8xbf16>
    %30 = vector.shape_cast %29 : vector<2x8x8xbf16> to vector<16x8xbf16>
    %c2 = arith.constant 2 : index
    %c0_23 = arith.constant 0 : index
    %c0_24 = arith.constant 0 : index
    %31 = vector.load %arg3[%c2, %c0_23, %c0_24] : memref<16x8x32xbf16, #tpu.memory_space<vmem>>, vector<1x8x32xbf16>
    %32 = vector.shape_cast %31 : vector<1x8x32xbf16> to vector<8x32xbf16>
    %cst_25 = arith.constant dense<0.000000e+00> : vector<16x32xf32>
    %33 = tpu.matmul %30, %32, %cst_25 {dimension_numbers = #tpu.dot_dimension_numbers<[1], [0], [0], [1], [0, 0, 1, 1], [], []>} : vector<16x8xbf16>, vector<8x32xbf16>, vector<16x32xf32> -> vector<16x32xf32>
    %34 = arith.addf %24, %33 : vector<16x32xf32>
    %c0_i32_26 = arith.constant 0 : i32
    %35 = arith.addi %0, %c0_i32_26 : i32
    %c1_i32_27 = arith.constant 1 : i32
    %36 = arith.addi %35, %c1_i32_27 : i32
    %c0_28 = arith.constant 0 : index
    %37 = arith.index_cast %36 : i32 to index
    %c1_29 = arith.constant 1 : index
    %c0_30 = arith.constant 0 : index
    %38 = vector.load %arg2[%c0_28, %37, %c1_29, %c0_30] : memref<1x10x10x8xbf16, #tpu.memory_space<vmem>>, vector<1x2x8x8xbf16>
    %39 = vector.shape_cast %38 : vector<1x2x8x8xbf16> to vector<2x8x8xbf16>
    %40 = vector.shape_cast %39 : vector<2x8x8xbf16> to vector<16x8xbf16>
    %c3 = arith.constant 3 : index
    %c0_31 = arith.constant 0 : index
    %c0_32 = arith.constant 0 : index
    %41 = vector.load %arg3[%c3, %c0_31, %c0_32] : memref<16x8x32xbf16, #tpu.memory_space<vmem>>, vector<1x8x32xbf16>
    %42 = vector.shape_cast %41 : vector<1x8x32xbf16> to vector<8x32xbf16>
    %cst_33 = arith.constant dense<0.000000e+00> : vector<16x32xf32>
    %43 = tpu.matmul %40, %42, %cst_33 {dimension_numbers = #tpu.dot_dimension_numbers<[1], [0], [0], [1], [0, 0, 1, 1], [], []>} : vector<16x8xbf16>, vector<8x32xbf16>, vector<16x32xf32> -> vector<16x32xf32>
    %44 = arith.addf %34, %43 : vector<16x32xf32>
    %45 = vector.broadcast %1 : vector<1x32xf32> to vector<16x32xf32>
    %46 = arith.addf %44, %45 : vector<16x32xf32>
    %47 = arith.truncf %46 : vector<16x32xf32> to vector<16x32xbf16>
    %48 = arith.extf %47 : vector<16x32xbf16> to vector<16x32xf32>
    %cst_34 = arith.constant dense<0.000000e+00> : vector<32xf32>
    %49 = vector.multi_reduction <add>, %48, %cst_34 [0] : vector<16x32xf32> to vector<32xf32>
    %50 = vector.shape_cast %49 : vector<32xf32> to vector<1x32xf32>
    %51 = arith.addf %2, %50 : vector<1x32xf32>
    %52 = arith.mulf %48, %48 : vector<16x32xf32>
    %cst_35 = arith.constant dense<0.000000e+00> : vector<32xf32>
    %53 = vector.multi_reduction <add>, %52, %cst_35 [0] : vector<16x32xf32> to vector<32xf32>
    %54 = vector.shape_cast %53 : vector<32xf32> to vector<1x32xf32>
    %55 = arith.addf %3, %54 : vector<1x32xf32>
    %56 = vector.shape_cast %47 : vector<16x32xbf16> to vector<2x8x32xbf16>
    %cst_36 = arith.constant 0.000000e+00 : f32
    %57 = vector.broadcast %cst_36 : f32 to vector<16x32xf32>
    %c0_i32_37 = arith.constant 0 : i32
    %58 = arith.addi %0, %c0_i32_37 : i32
    %c0_i32_38 = arith.constant 0 : i32
    %59 = arith.addi %58, %c0_i32_38 : i32
    %c0_39 = arith.constant 0 : index
    %60 = arith.index_cast %59 : i32 to index
    %c1_40 = arith.constant 1 : index
    %c0_41 = arith.constant 0 : index
    %61 = vector.load %arg2[%c0_39, %60, %c1_40, %c0_41] : memref<1x10x10x8xbf16, #tpu.memory_space<vmem>>, vector<1x2x8x8xbf16>
    %62 = vector.shape_cast %61 : vector<1x2x8x8xbf16> to vector<2x8x8xbf16>
    %63 = vector.shape_cast %62 : vector<2x8x8xbf16> to vector<16x8xbf16>
    %c4 = arith.constant 4 : index
    %c0_42 = arith.constant 0 : index
    %c0_43 = arith.constant 0 : index
    %64 = vector.load %arg3[%c4, %c0_42, %c0_43] : memref<16x8x32xbf16, #tpu.memory_space<vmem>>, vector<1x8x32xbf16>
    %65 = vector.shape_cast %64 : vector<1x8x32xbf16> to vector<8x32xbf16>
    %cst_44 = arith.constant dense<0.000000e+00> : vector<16x32xf32>
    %66 = tpu.matmul %63, %65, %cst_44 {dimension_numbers = #tpu.dot_dimension_numbers<[1], [0], [0], [1], [0, 0, 1, 1], [], []>} : vector<16x8xbf16>, vector<8x32xbf16>, vector<16x32xf32> -> vector<16x32xf32>
    %67 = arith.addf %57, %66 : vector<16x32xf32>
    %c0_i32_45 = arith.constant 0 : i32
    %68 = arith.addi %0, %c0_i32_45 : i32
    %c0_i32_46 = arith.constant 0 : i32
    %69 = arith.addi %68, %c0_i32_46 : i32
    %c0_47 = arith.constant 0 : index
    %70 = arith.index_cast %69 : i32 to index
    %c2_48 = arith.constant 2 : index
    %c0_49 = arith.constant 0 : index
    %71 = vector.load %arg2[%c0_47, %70, %c2_48, %c0_49] : memref<1x10x10x8xbf16, #tpu.memory_space<vmem>>, vector<1x2x8x8xbf16>
    %72 = vector.shape_cast %71 : vector<1x2x8x8xbf16> to vector<2x8x8xbf16>
    %73 = vector.shape_cast %72 : vector<2x8x8xbf16> to vector<16x8xbf16>
    %c5 = arith.constant 5 : index
    %c0_50 = arith.constant 0 : index
    %c0_51 = arith.constant 0 : index
    %74 = vector.load %arg3[%c5, %c0_50, %c0_51] : memref<16x8x32xbf16, #tpu.memory_space<vmem>>, vector<1x8x32xbf16>
    %75 = vector.shape_cast %74 : vector<1x8x32xbf16> to vector<8x32xbf16>
    %cst_52 = arith.constant dense<0.000000e+00> : vector<16x32xf32>
    %76 = tpu.matmul %73, %75, %cst_52 {dimension_numbers = #tpu.dot_dimension_numbers<[1], [0], [0], [1], [0, 0, 1, 1], [], []>} : vector<16x8xbf16>, vector<8x32xbf16>, vector<16x32xf32> -> vector<16x32xf32>
    %77 = arith.addf %67, %76 : vector<16x32xf32>
    %c0_i32_53 = arith.constant 0 : i32
    %78 = arith.addi %0, %c0_i32_53 : i32
    %c1_i32_54 = arith.constant 1 : i32
    %79 = arith.addi %78, %c1_i32_54 : i32
    %c0_55 = arith.constant 0 : index
    %80 = arith.index_cast %79 : i32 to index
    %c1_56 = arith.constant 1 : index
    %c0_57 = arith.constant 0 : index
    %81 = vector.load %arg2[%c0_55, %80, %c1_56, %c0_57] : memref<1x10x10x8xbf16, #tpu.memory_space<vmem>>, vector<1x2x8x8xbf16>
    %82 = vector.shape_cast %81 : vector<1x2x8x8xbf16> to vector<2x8x8xbf16>
    %83 = vector.shape_cast %82 : vector<2x8x8xbf16> to vector<16x8xbf16>
    %c6 = arith.constant 6 : index
    %c0_58 = arith.constant 0 : index
    %c0_59 = arith.constant 0 : index
    %84 = vector.load %arg3[%c6, %c0_58, %c0_59] : memref<16x8x32xbf16, #tpu.memory_space<vmem>>, vector<1x8x32xbf16>
    %85 = vector.shape_cast %84 : vector<1x8x32xbf16> to vector<8x32xbf16>
    %cst_60 = arith.constant dense<0.000000e+00> : vector<16x32xf32>
    %86 = tpu.matmul %83, %85, %cst_60 {dimension_numbers = #tpu.dot_dimension_numbers<[1], [0], [0], [1], [0, 0, 1, 1], [], []>} : vector<16x8xbf16>, vector<8x32xbf16>, vector<16x32xf32> -> vector<16x32xf32>
    %87 = arith.addf %77, %86 : vector<16x32xf32>
    %c0_i32_61 = arith.constant 0 : i32
    %88 = arith.addi %0, %c0_i32_61 : i32
    %c1_i32_62 = arith.constant 1 : i32
    %89 = arith.addi %88, %c1_i32_62 : i32
    %c0_63 = arith.constant 0 : index
    %90 = arith.index_cast %89 : i32 to index
    %c2_64 = arith.constant 2 : index
    %c0_65 = arith.constant 0 : index
    %91 = vector.load %arg2[%c0_63, %90, %c2_64, %c0_65] : memref<1x10x10x8xbf16, #tpu.memory_space<vmem>>, vector<1x2x8x8xbf16>
    %92 = vector.shape_cast %91 : vector<1x2x8x8xbf16> to vector<2x8x8xbf16>
    %93 = vector.shape_cast %92 : vector<2x8x8xbf16> to vector<16x8xbf16>
    %c7 = arith.constant 7 : index
    %c0_66 = arith.constant 0 : index
    %c0_67 = arith.constant 0 : index
    %94 = vector.load %arg3[%c7, %c0_66, %c0_67] : memref<16x8x32xbf16, #tpu.memory_space<vmem>>, vector<1x8x32xbf16>
    %95 = vector.shape_cast %94 : vector<1x8x32xbf16> to vector<8x32xbf16>
    %cst_68 = arith.constant dense<0.000000e+00> : vector<16x32xf32>
    %96 = tpu.matmul %93, %95, %cst_68 {dimension_numbers = #tpu.dot_dimension_numbers<[1], [0], [0], [1], [0, 0, 1, 1], [], []>} : vector<16x8xbf16>, vector<8x32xbf16>, vector<16x32xf32> -> vector<16x32xf32>
    %97 = arith.addf %87, %96 : vector<16x32xf32>
    %98 = vector.broadcast %1 : vector<1x32xf32> to vector<16x32xf32>
    %99 = arith.addf %97, %98 : vector<16x32xf32>
    %100 = arith.truncf %99 : vector<16x32xf32> to vector<16x32xbf16>
    %101 = arith.extf %100 : vector<16x32xbf16> to vector<16x32xf32>
    %cst_69 = arith.constant dense<0.000000e+00> : vector<32xf32>
    %102 = vector.multi_reduction <add>, %101, %cst_69 [0] : vector<16x32xf32> to vector<32xf32>
    %103 = vector.shape_cast %102 : vector<32xf32> to vector<1x32xf32>
    %104 = arith.addf %51, %103 : vector<1x32xf32>
    %105 = arith.mulf %101, %101 : vector<16x32xf32>
    %cst_70 = arith.constant dense<0.000000e+00> : vector<32xf32>
    %106 = vector.multi_reduction <add>, %105, %cst_70 [0] : vector<16x32xf32> to vector<32xf32>
    %107 = vector.shape_cast %106 : vector<32xf32> to vector<1x32xf32>
    %108 = arith.addf %55, %107 : vector<1x32xf32>
    %109 = vector.shape_cast %100 : vector<16x32xbf16> to vector<2x8x32xbf16>
    %cst_71 = arith.constant 0.000000e+00 : f32
    %110 = vector.broadcast %cst_71 : f32 to vector<16x32xf32>
    %c1_i32_72 = arith.constant 1 : i32
    %111 = arith.addi %0, %c1_i32_72 : i32
    %c0_i32_73 = arith.constant 0 : i32
    %112 = arith.addi %111, %c0_i32_73 : i32
    %c0_74 = arith.constant 0 : index
    %113 = arith.index_cast %112 : i32 to index
    %c0_75 = arith.constant 0 : index
    %c0_76 = arith.constant 0 : index
    %114 = vector.load %arg2[%c0_74, %113, %c0_75, %c0_76] : memref<1x10x10x8xbf16, #tpu.memory_space<vmem>>, vector<1x2x8x8xbf16>
    %115 = vector.shape_cast %114 : vector<1x2x8x8xbf16> to vector<2x8x8xbf16>
    %116 = vector.shape_cast %115 : vector<2x8x8xbf16> to vector<16x8xbf16>
    %c8 = arith.constant 8 : index
    %c0_77 = arith.constant 0 : index
    %c0_78 = arith.constant 0 : index
    %117 = vector.load %arg3[%c8, %c0_77, %c0_78] : memref<16x8x32xbf16, #tpu.memory_space<vmem>>, vector<1x8x32xbf16>
    %118 = vector.shape_cast %117 : vector<1x8x32xbf16> to vector<8x32xbf16>
    %cst_79 = arith.constant dense<0.000000e+00> : vector<16x32xf32>
    %119 = tpu.matmul %116, %118, %cst_79 {dimension_numbers = #tpu.dot_dimension_numbers<[1], [0], [0], [1], [0, 0, 1, 1], [], []>} : vector<16x8xbf16>, vector<8x32xbf16>, vector<16x32xf32> -> vector<16x32xf32>
    %120 = arith.addf %110, %119 : vector<16x32xf32>
    %c1_i32_80 = arith.constant 1 : i32
    %121 = arith.addi %0, %c1_i32_80 : i32
    %c0_i32_81 = arith.constant 0 : i32
    %122 = arith.addi %121, %c0_i32_81 : i32
    %c0_82 = arith.constant 0 : index
    %123 = arith.index_cast %122 : i32 to index
    %c1_83 = arith.constant 1 : index
    %c0_84 = arith.constant 0 : index
    %124 = vector.load %arg2[%c0_82, %123, %c1_83, %c0_84] : memref<1x10x10x8xbf16, #tpu.memory_space<vmem>>, vector<1x2x8x8xbf16>
    %125 = vector.shape_cast %124 : vector<1x2x8x8xbf16> to vector<2x8x8xbf16>
    %126 = vector.shape_cast %125 : vector<2x8x8xbf16> to vector<16x8xbf16>
    %c9 = arith.constant 9 : index
    %c0_85 = arith.constant 0 : index
    %c0_86 = arith.constant 0 : index
    %127 = vector.load %arg3[%c9, %c0_85, %c0_86] : memref<16x8x32xbf16, #tpu.memory_space<vmem>>, vector<1x8x32xbf16>
    %128 = vector.shape_cast %127 : vector<1x8x32xbf16> to vector<8x32xbf16>
    %cst_87 = arith.constant dense<0.000000e+00> : vector<16x32xf32>
    %129 = tpu.matmul %126, %128, %cst_87 {dimension_numbers = #tpu.dot_dimension_numbers<[1], [0], [0], [1], [0, 0, 1, 1], [], []>} : vector<16x8xbf16>, vector<8x32xbf16>, vector<16x32xf32> -> vector<16x32xf32>
    %130 = arith.addf %120, %129 : vector<16x32xf32>
    %c1_i32_88 = arith.constant 1 : i32
    %131 = arith.addi %0, %c1_i32_88 : i32
    %c1_i32_89 = arith.constant 1 : i32
    %132 = arith.addi %131, %c1_i32_89 : i32
    %c0_90 = arith.constant 0 : index
    %133 = arith.index_cast %132 : i32 to index
    %c0_91 = arith.constant 0 : index
    %c0_92 = arith.constant 0 : index
    %134 = vector.load %arg2[%c0_90, %133, %c0_91, %c0_92] : memref<1x10x10x8xbf16, #tpu.memory_space<vmem>>, vector<1x2x8x8xbf16>
    %135 = vector.shape_cast %134 : vector<1x2x8x8xbf16> to vector<2x8x8xbf16>
    %136 = vector.shape_cast %135 : vector<2x8x8xbf16> to vector<16x8xbf16>
    %c10 = arith.constant 10 : index
    %c0_93 = arith.constant 0 : index
    %c0_94 = arith.constant 0 : index
    %137 = vector.load %arg3[%c10, %c0_93, %c0_94] : memref<16x8x32xbf16, #tpu.memory_space<vmem>>, vector<1x8x32xbf16>
    %138 = vector.shape_cast %137 : vector<1x8x32xbf16> to vector<8x32xbf16>
    %cst_95 = arith.constant dense<0.000000e+00> : vector<16x32xf32>
    %139 = tpu.matmul %136, %138, %cst_95 {dimension_numbers = #tpu.dot_dimension_numbers<[1], [0], [0], [1], [0, 0, 1, 1], [], []>} : vector<16x8xbf16>, vector<8x32xbf16>, vector<16x32xf32> -> vector<16x32xf32>
    %140 = arith.addf %130, %139 : vector<16x32xf32>
    %c1_i32_96 = arith.constant 1 : i32
    %141 = arith.addi %0, %c1_i32_96 : i32
    %c1_i32_97 = arith.constant 1 : i32
    %142 = arith.addi %141, %c1_i32_97 : i32
    %c0_98 = arith.constant 0 : index
    %143 = arith.index_cast %142 : i32 to index
    %c1_99 = arith.constant 1 : index
    %c0_100 = arith.constant 0 : index
    %144 = vector.load %arg2[%c0_98, %143, %c1_99, %c0_100] : memref<1x10x10x8xbf16, #tpu.memory_space<vmem>>, vector<1x2x8x8xbf16>
    %145 = vector.shape_cast %144 : vector<1x2x8x8xbf16> to vector<2x8x8xbf16>
    %146 = vector.shape_cast %145 : vector<2x8x8xbf16> to vector<16x8xbf16>
    %c11 = arith.constant 11 : index
    %c0_101 = arith.constant 0 : index
    %c0_102 = arith.constant 0 : index
    %147 = vector.load %arg3[%c11, %c0_101, %c0_102] : memref<16x8x32xbf16, #tpu.memory_space<vmem>>, vector<1x8x32xbf16>
    %148 = vector.shape_cast %147 : vector<1x8x32xbf16> to vector<8x32xbf16>
    %cst_103 = arith.constant dense<0.000000e+00> : vector<16x32xf32>
    %149 = tpu.matmul %146, %148, %cst_103 {dimension_numbers = #tpu.dot_dimension_numbers<[1], [0], [0], [1], [0, 0, 1, 1], [], []>} : vector<16x8xbf16>, vector<8x32xbf16>, vector<16x32xf32> -> vector<16x32xf32>
    %150 = arith.addf %140, %149 : vector<16x32xf32>
    %151 = vector.broadcast %1 : vector<1x32xf32> to vector<16x32xf32>
    %152 = arith.addf %150, %151 : vector<16x32xf32>
    %153 = arith.truncf %152 : vector<16x32xf32> to vector<16x32xbf16>
    %154 = arith.extf %153 : vector<16x32xbf16> to vector<16x32xf32>
    %cst_104 = arith.constant dense<0.000000e+00> : vector<32xf32>
    %155 = vector.multi_reduction <add>, %154, %cst_104 [0] : vector<16x32xf32> to vector<32xf32>
    %156 = vector.shape_cast %155 : vector<32xf32> to vector<1x32xf32>
    %157 = arith.addf %104, %156 : vector<1x32xf32>
    %158 = arith.mulf %154, %154 : vector<16x32xf32>
    %cst_105 = arith.constant dense<0.000000e+00> : vector<32xf32>
    %159 = vector.multi_reduction <add>, %158, %cst_105 [0] : vector<16x32xf32> to vector<32xf32>
    %160 = vector.shape_cast %159 : vector<32xf32> to vector<1x32xf32>
    %161 = arith.addf %108, %160 : vector<1x32xf32>
    %162 = vector.shape_cast %153 : vector<16x32xbf16> to vector<2x8x32xbf16>
    %cst_106 = arith.constant 0.000000e+00 : f32
    %163 = vector.broadcast %cst_106 : f32 to vector<16x32xf32>
    %c1_i32_107 = arith.constant 1 : i32
    %164 = arith.addi %0, %c1_i32_107 : i32
    %c0_i32_108 = arith.constant 0 : i32
    %165 = arith.addi %164, %c0_i32_108 : i32
    %c0_109 = arith.constant 0 : index
    %166 = arith.index_cast %165 : i32 to index
    %c1_110 = arith.constant 1 : index
    %c0_111 = arith.constant 0 : index
    %167 = vector.load %arg2[%c0_109, %166, %c1_110, %c0_111] : memref<1x10x10x8xbf16, #tpu.memory_space<vmem>>, vector<1x2x8x8xbf16>
    %168 = vector.shape_cast %167 : vector<1x2x8x8xbf16> to vector<2x8x8xbf16>
    %169 = vector.shape_cast %168 : vector<2x8x8xbf16> to vector<16x8xbf16>
    %c12 = arith.constant 12 : index
    %c0_112 = arith.constant 0 : index
    %c0_113 = arith.constant 0 : index
    %170 = vector.load %arg3[%c12, %c0_112, %c0_113] : memref<16x8x32xbf16, #tpu.memory_space<vmem>>, vector<1x8x32xbf16>
    %171 = vector.shape_cast %170 : vector<1x8x32xbf16> to vector<8x32xbf16>
    %cst_114 = arith.constant dense<0.000000e+00> : vector<16x32xf32>
    %172 = tpu.matmul %169, %171, %cst_114 {dimension_numbers = #tpu.dot_dimension_numbers<[1], [0], [0], [1], [0, 0, 1, 1], [], []>} : vector<16x8xbf16>, vector<8x32xbf16>, vector<16x32xf32> -> vector<16x32xf32>
    %173 = arith.addf %163, %172 : vector<16x32xf32>
    %c1_i32_115 = arith.constant 1 : i32
    %174 = arith.addi %0, %c1_i32_115 : i32
    %c0_i32_116 = arith.constant 0 : i32
    %175 = arith.addi %174, %c0_i32_116 : i32
    %c0_117 = arith.constant 0 : index
    %176 = arith.index_cast %175 : i32 to index
    %c2_118 = arith.constant 2 : index
    %c0_119 = arith.constant 0 : index
    %177 = vector.load %arg2[%c0_117, %176, %c2_118, %c0_119] : memref<1x10x10x8xbf16, #tpu.memory_space<vmem>>, vector<1x2x8x8xbf16>
    %178 = vector.shape_cast %177 : vector<1x2x8x8xbf16> to vector<2x8x8xbf16>
    %179 = vector.shape_cast %178 : vector<2x8x8xbf16> to vector<16x8xbf16>
    %c13 = arith.constant 13 : index
    %c0_120 = arith.constant 0 : index
    %c0_121 = arith.constant 0 : index
    %180 = vector.load %arg3[%c13, %c0_120, %c0_121] : memref<16x8x32xbf16, #tpu.memory_space<vmem>>, vector<1x8x32xbf16>
    %181 = vector.shape_cast %180 : vector<1x8x32xbf16> to vector<8x32xbf16>
    %cst_122 = arith.constant dense<0.000000e+00> : vector<16x32xf32>
    %182 = tpu.matmul %179, %181, %cst_122 {dimension_numbers = #tpu.dot_dimension_numbers<[1], [0], [0], [1], [0, 0, 1, 1], [], []>} : vector<16x8xbf16>, vector<8x32xbf16>, vector<16x32xf32> -> vector<16x32xf32>
    %183 = arith.addf %173, %182 : vector<16x32xf32>
    %c1_i32_123 = arith.constant 1 : i32
    %184 = arith.addi %0, %c1_i32_123 : i32
    %c1_i32_124 = arith.constant 1 : i32
    %185 = arith.addi %184, %c1_i32_124 : i32
    %c0_125 = arith.constant 0 : index
    %186 = arith.index_cast %185 : i32 to index
    %c1_126 = arith.constant 1 : index
    %c0_127 = arith.constant 0 : index
    %187 = vector.load %arg2[%c0_125, %186, %c1_126, %c0_127] : memref<1x10x10x8xbf16, #tpu.memory_space<vmem>>, vector<1x2x8x8xbf16>
    %188 = vector.shape_cast %187 : vector<1x2x8x8xbf16> to vector<2x8x8xbf16>
    %189 = vector.shape_cast %188 : vector<2x8x8xbf16> to vector<16x8xbf16>
    %c14 = arith.constant 14 : index
    %c0_128 = arith.constant 0 : index
    %c0_129 = arith.constant 0 : index
    %190 = vector.load %arg3[%c14, %c0_128, %c0_129] : memref<16x8x32xbf16, #tpu.memory_space<vmem>>, vector<1x8x32xbf16>
    %191 = vector.shape_cast %190 : vector<1x8x32xbf16> to vector<8x32xbf16>
    %cst_130 = arith.constant dense<0.000000e+00> : vector<16x32xf32>
    %192 = tpu.matmul %189, %191, %cst_130 {dimension_numbers = #tpu.dot_dimension_numbers<[1], [0], [0], [1], [0, 0, 1, 1], [], []>} : vector<16x8xbf16>, vector<8x32xbf16>, vector<16x32xf32> -> vector<16x32xf32>
    %193 = arith.addf %183, %192 : vector<16x32xf32>
    %c1_i32_131 = arith.constant 1 : i32
    %194 = arith.addi %0, %c1_i32_131 : i32
    %c1_i32_132 = arith.constant 1 : i32
    %195 = arith.addi %194, %c1_i32_132 : i32
    %c0_133 = arith.constant 0 : index
    %196 = arith.index_cast %195 : i32 to index
    %c2_134 = arith.constant 2 : index
    %c0_135 = arith.constant 0 : index
    %197 = vector.load %arg2[%c0_133, %196, %c2_134, %c0_135] : memref<1x10x10x8xbf16, #tpu.memory_space<vmem>>, vector<1x2x8x8xbf16>
    %198 = vector.shape_cast %197 : vector<1x2x8x8xbf16> to vector<2x8x8xbf16>
    %199 = vector.shape_cast %198 : vector<2x8x8xbf16> to vector<16x8xbf16>
    %c15 = arith.constant 15 : index
    %c0_136 = arith.constant 0 : index
    %c0_137 = arith.constant 0 : index
    %200 = vector.load %arg3[%c15, %c0_136, %c0_137] : memref<16x8x32xbf16, #tpu.memory_space<vmem>>, vector<1x8x32xbf16>
    %201 = vector.shape_cast %200 : vector<1x8x32xbf16> to vector<8x32xbf16>
    %cst_138 = arith.constant dense<0.000000e+00> : vector<16x32xf32>
    %202 = tpu.matmul %199, %201, %cst_138 {dimension_numbers = #tpu.dot_dimension_numbers<[1], [0], [0], [1], [0, 0, 1, 1], [], []>} : vector<16x8xbf16>, vector<8x32xbf16>, vector<16x32xf32> -> vector<16x32xf32>
    %203 = arith.addf %193, %202 : vector<16x32xf32>
    %204 = vector.broadcast %1 : vector<1x32xf32> to vector<16x32xf32>
    %205 = arith.addf %203, %204 : vector<16x32xf32>
    %206 = arith.truncf %205 : vector<16x32xf32> to vector<16x32xbf16>
    %207 = arith.extf %206 : vector<16x32xbf16> to vector<16x32xf32>
    %cst_139 = arith.constant dense<0.000000e+00> : vector<32xf32>
    %208 = vector.multi_reduction <add>, %207, %cst_139 [0] : vector<16x32xf32> to vector<32xf32>
    %209 = vector.shape_cast %208 : vector<32xf32> to vector<1x32xf32>
    %210 = arith.addf %157, %209 : vector<1x32xf32>
    %211 = arith.mulf %207, %207 : vector<16x32xf32>
    %cst_140 = arith.constant dense<0.000000e+00> : vector<32xf32>
    %212 = vector.multi_reduction <add>, %211, %cst_140 [0] : vector<16x32xf32> to vector<32xf32>
    %213 = vector.shape_cast %212 : vector<32xf32> to vector<1x32xf32>
    %214 = arith.addf %161, %213 : vector<1x32xf32>
    %215 = vector.shape_cast %206 : vector<16x32xbf16> to vector<2x8x32xbf16>
    %216 = vector.shape_cast %56 : vector<2x8x32xbf16> to vector<1x2x8x32xbf16>
    %217 = vector.shape_cast %109 : vector<2x8x32xbf16> to vector<1x2x8x32xbf16>
    %218 = vector.shape_cast %162 : vector<2x8x32xbf16> to vector<1x2x8x32xbf16>
    %219 = vector.shape_cast %215 : vector<2x8x32xbf16> to vector<1x2x8x32xbf16>
    %220 = tpu.concatenate %216, %217, %218, %219 in 0 : vector<1x2x8x32xbf16>, vector<1x2x8x32xbf16>, vector<1x2x8x32xbf16>, vector<1x2x8x32xbf16> -> vector<4x2x8x32xbf16>
    %c0_141 = arith.constant 0 : index
    %c0_142 = arith.constant 0 : index
    %c0_143 = arith.constant 0 : index
    %c0_144 = arith.constant 0 : index
    %c0_145 = arith.constant 0 : index
    %221 = vector.load %arg5[%c0_141, %c0_142, %c0_143, %c0_144, %c0_145] : memref<1x4x2x8x32xbf16, #tpu.memory_space<vmem>>, vector<1x4x2x8x32xbf16>
    %222 = vector.shape_cast %221 : vector<1x4x2x8x32xbf16> to vector<4x2x8x32xbf16>
    %223 = vector.shape_cast %220 : vector<4x2x8x32xbf16> to vector<1x4x2x8x32xbf16>
    tpu.vector_store %arg5[%c0_141, %c0_142, %c0_143, %c0_144, %c0_145], %223 {strides = array<i32>} : memref<1x4x2x8x32xbf16, #tpu.memory_space<vmem>>, vector<1x4x2x8x32xbf16>,
    %224 = tpu.concatenate %210, %214 in 0 : vector<1x32xf32>, vector<1x32xf32> -> vector<2x32xf32>
    %225 = vector.shape_cast %224 : vector<2x32xf32> to vector<1x1x2x32xf32>
    %c0_146 = arith.constant 0 : index
    %c0_147 = arith.constant 0 : index
    %c0_148 = arith.constant 0 : index
    %c0_149 = arith.constant 0 : index
    %226 = vector.load %arg6[%c0_146, %c0_147, %c0_148, %c0_149] : memref<1x1x2x32xf32, #tpu.memory_space<vmem>>, vector<1x1x2x32xf32>
    tpu.vector_store %arg6[%c0_146, %c0_147, %c0_148, %c0_149], %225 {strides = array<i32>} : memref<1x1x2x32xf32, #tpu.memory_space<vmem>>, vector<1x1x2x32xf32>,
    return
  }
  func.func @transform_0(%arg0: i32, %arg1: i32) -> (i32, i32, i32, i32) {
    %c0_i32 = arith.constant 0 : i32
    %c0_i32_0 = arith.constant 0 : i32
    %c0_i32_1 = arith.constant 0 : i32
    %c0_i32_2 = arith.constant 0 : i32
    return %arg0, %c0_i32, %c0_i32_0, %c0_i32_1 : i32, i32, i32, i32
  }
  func.func @transform_1(%arg0: i32, %arg1: i32) -> (i32, i32, i32) {
    %c0_i32 = arith.constant 0 : i32
    %c0_i32_0 = arith.constant 0 : i32
    %c0_i32_1 = arith.constant 0 : i32
    %c0_i32_2 = arith.constant 0 : i32
    return %c0_i32, %c0_i32_0, %c0_i32_1 : i32, i32, i32
  }
  func.func @transform_2(%arg0: i32, %arg1: i32) -> (i32, i32) {
    %c0_i32 = arith.constant 0 : i32
    %c0_i32_0 = arith.constant 0 : i32
    %c0_i32_1 = arith.constant 0 : i32
    return %c0_i32, %c0_i32_0 : i32, i32
  }
  func.func @transform_3(%arg0: i32, %arg1: i32) -> (i32, i32, i32, i32, i32) {
    %c0_i32 = arith.constant 0 : i32
    %c0_i32_0 = arith.constant 0 : i32
    %c0_i32_1 = arith.constant 0 : i32
    %c0_i32_2 = arith.constant 0 : i32
    return %arg0, %c0_i32, %arg1, %c0_i32_0, %c0_i32_1 : i32, i32, i32, i32, i32
  }
  func.func @transform_4(%arg0: i32, %arg1: i32) -> (i32, i32, i32, i32) {
    %c0_i32 = arith.constant 0 : i32
    %c0_i32_0 = arith.constant 0 : i32
    %c0_i32_1 = arith.constant 0 : i32
    return %arg0, %arg1, %c0_i32, %c0_i32_0 : i32, i32, i32, i32
  }
}

</mosaic_0001>

<llo_original>
// kernel: upsample_convt.3
$region0: #{upsample_convt.3}
  #allocation0 [shape = 'u32[]', space=smem, size = 0x4, offset = 0x4, fixed_abs, tag = 'smem constant byte address 0x4 - core index']
  #allocation1 [shape = 'u32[144,128]{1,0:T(1,128)}', space=vmem, size = 0x12000, scoped, tag = 'internal scratch']
  %s0 = inlined_call_operand.vmem [shape: bf16[2,4,8,8,32], index: 0, kind: input, shape index: {}]
  %s1 = inlined_call_operand.vmem [shape: f32[2,4,2,32], index: 1, kind: input, shape index: {}]
  %s2 = inlined_call_operand.vmem [shape: f32[16,32], index: 2, kind: input, shape index: {}]
  %s3 = inlined_call_operand.vmem [shape: f32[2,32], index: 3, kind: input, shape index: {}]
  %s4 = inlined_call_operand.vmem [shape: bf16[2,4,8,8,32], index: 4, kind: output, shape index: {}]
  %s5 = sld [smem:[#allocation0]]
  $region127: #{upsample_convt.3} parent=0
    _
  %s7 = ssub.s32 1, %s5
  %s8 = scalar_select 0, %s7, %s5
  $region1: #{upsample_convt.3} parent=0
    #allocation2 [shape = 'u8[32768]{0}', space=vmem, size = 0x8000, scoped, tag = 'input window, operand 0']
    #allocation3 [shape = 'u8[32768]{0}', space=vmem, size = 0x8000, scoped, tag = 'output window, operand 0']
    loop: start=0, step=1, limit=10
    $region2: #{upsample_convt.3} parent=1 // loop_pre_header
      _
    $region3: #{upsample_convt.3} parent=1 // loop_header
      %s10 = sphi 0, %s14
      %p11 = scmp.ge.s32.totalorder %s10, 10
      %s17 = sphi 0, %s29
      %s18 = sphi 0, %s25
      %s19 = sphi 0, %s17
      %s20 = sphi 0, %s18
      %s21 = sphi 0, %s19
      %s22 = sphi 0, %s20
      %s34 = sphi 0, %s36
      %s37 = sphi 0, %s34
      %s38 = sphi 0, %s37
      %s54 = sphi 0, %s38
      %s60 = sphi 0, %s62
      %s63 = sphi 0, %s60
      %s64 = sphi 0, %s63
      %s80 = sphi 0, %s64
      %s84 = sphi 0, %s84
      %s86 = sphi 0, %s84
      %s87 = sphi 0, %s86
      %s101 = sphi 0, %s87
      %s105 = sphi 0, %s105
      %s107 = sphi 0, %s105
      %s108 = sphi 0, %s107
      %s122 = sphi 0, %s108
      %s130 = sphi 0, %s132
      %s133 = sphi 0, %s130
      %s134 = sphi 0, %s133
      %s150 = sphi 0, %s134
    $region4: #{upsample_convt.3} parent=1 // loop_header_branch
      %13 = sbr.rel (%p11) target = $region8
    $region5: #{upsample_convt.3} parent=1 // loop_body
      %s15 = ssub.s32 %s10, 1
      %s16 = ssub.s32 %s10, 2
      %s23 = sadd.s32 1, %s18
      %p24 = scmp.ge.s32.totalorder %s23, 4
      %s25 = scalar_select %p24, 0, %s23
      %s26 = sadd.s32 1, %s17
      %s27 = scalar_select %p24, %s26, %s17
      %p28 = scmp.ge.s32.totalorder %s27, 2
      %s29 = scalar_select %p28, 0, %s27
      %s30 = ssub.s32 %s17, %s29
      %s31 = ssub.s32 %s18, %s25
      %s32 = sor.u32 %s30, %s31
      %p33 = scmp.eq.s32.totalorder %s32, 0
      %s35 = sadd.s32 %s34, 1
      %s36 = scalar_select %p33, %s34, %s35
      %p39 = pneg %p33
      %p40 = scmp.eq.s32.totalorder %s10, 7
      %p41 = por %p39, %p40
      %p42 = scmp.ne.s32.totalorder %s34, %s37
      %p43 = scmp.eq.s32.totalorder %s10, 0
      %p44 = por %p42, %p43
      %p45 = scmp.ne.s32.totalorder %s34, %s37
      %p46 = scmp.eq.s32.totalorder %s15, 7
      %p47 = por %p45, %p46
      %p48 = scmp.ne.s32.totalorder %s37, %s38
      %p49 = scmp.eq.s32.totalorder %s15, 0
      %p50 = por %p48, %p49
      %p51 = scmp.ne.s32.totalorder %s37, %s38
      %p52 = scmp.eq.s32.totalorder %s16, 7
      %p53 = por %p51, %p52
      %p55 = scmp.ne.s32.totalorder %s38, %s54
      %p56 = scmp.eq.s32.totalorder %s16, 0
      %p57 = por %p55, %p56
      %s58 = ssub.s32 %s17, %s29
      %p59 = scmp.eq.s32.totalorder %s58, 0
      %s61 = sadd.s32 %s60, 1
      %s62 = scalar_select %p59, %s60, %s61
      %p65 = pneg %p59
      %p66 = scmp.eq.s32.totalorder %s10, 7
      %p67 = por %p65, %p66
      %p68 = scmp.ne.s32.totalorder %s60, %s63
      %p69 = scmp.eq.s32.totalorder %s10, 0
      %p70 = por %p68, %p69
      %p71 = scmp.ne.s32.totalorder %s60, %s63
      %p72 = scmp.eq.s32.totalorder %s15, 7
      %p73 = por %p71, %p72
      %p74 = scmp.ne.s32.totalorder %s63, %s64
      %p75 = scmp.eq.s32.totalorder %s15, 0
      %p76 = por %p74, %p75
      %p77 = scmp.ne.s32.totalorder %s63, %s64
      %p78 = scmp.eq.s32.totalorder %s16, 7
      %p79 = por %p77, %p78
      %p81 = scmp.ne.s32.totalorder %s64, %s80
      %p82 = scmp.eq.s32.totalorder %s16, 0
      %p83 = por %p81, %p82
      %s85 = sadd.s32 %s84, 1
      %p88 = scmp.eq.s32.totalorder %s10, 7
      %p89 = scmp.ne.s32.totalorder %s84, %s86
      %p90 = scmp.eq.s32.totalorder %s10, 0
      %p91 = por %p89, %p90
      %p92 = scmp.ne.s32.totalorder %s84, %s86
      %p93 = scmp.eq.s32.totalorder %s15, 7
      %p94 = por %p92, %p93
      %p95 = scmp.ne.s32.totalorder %s86, %s87
      %p96 = scmp.eq.s32.totalorder %s15, 0
      %p97 = por %p95, %p96
      %p98 = scmp.ne.s32.totalorder %s86, %s87
      %p99 = scmp.eq.s32.totalorder %s16, 7
      %p100 = por %p98, %p99
      %p102 = scmp.ne.s32.totalorder %s87, %s101
      %p103 = scmp.eq.s32.totalorder %s16, 0
      %p104 = por %p102, %p103
      %s106 = sadd.s32 %s105, 1
      %p109 = scmp.eq.s32.totalorder %s10, 7
      %p110 = scmp.ne.s32.totalorder %s105, %s107
      %p111 = scmp.eq.s32.totalorder %s10, 0
      %p112 = por %p110, %p111
      %p113 = scmp.ne.s32.totalorder %s105, %s107
      %p114 = scmp.eq.s32.totalorder %s15, 7
      %p115 = por %p113, %p114
      %p116 = scmp.ne.s32.totalorder %s107, %s108
      %p117 = scmp.eq.s32.totalorder %s15, 0
      %p118 = por %p116, %p117
      %p119 = scmp.ne.s32.totalorder %s107, %s108
      %p120 = scmp.eq.s32.totalorder %s16, 7
      %p121 = por %p119, %p120
      %p123 = scmp.ne.s32.totalorder %s108, %s122
      %p124 = scmp.eq.s32.totalorder %s16, 0
      %p125 = por %p123, %p124
      %s126 = ssub.s32 %s17, %s29
      %s127 = ssub.s32 %s18, %s25
      %s128 = sor.u32 %s126, %s127
      %p129 = scmp.eq.s32.totalorder %s128, 0
      %s131 = sadd.s32 %s130, 1
      %s132 = scalar_select %p129, %s130, %s131
      %p135 = pneg %p129
      %p136 = scmp.eq.s32.totalorder %s10, 7
      %p137 = por %p135, %p136
      %p138 = scmp.ne.s32.totalorder %s130, %s133
      %p139 = scmp.eq.s32.totalorder %s10, 0
      %p140 = por %p138, %p139
      %p141 = scmp.ne.s32.totalorder %s130, %s133
      %p142 = scmp.eq.s32.totalorder %s15, 7
      %p143 = por %p141, %p142
      %p144 = scmp.ne.s32.totalorder %s133, %s134
      %p145 = scmp.eq.s32.totalorder %s15, 0
      %p146 = por %p144, %p145
      %p147 = scmp.ne.s32.totalorder %s133, %s134
      %p148 = scmp.eq.s32.totalorder %s16, 7
      %p149 = por %p147, %p148
      %p151 = scmp.ne.s32.totalorder %s134, %s150
      %p152 = scmp.eq.s32.totalorder %s16, 0
      %p153 = por %p151, %p152
      %p154 = scmp.le.s32.totalorder 1, %s10
      %p155 = scmp.lt.s32.totalorder %s10, 9
      %p156 = pnand %p154, %p155
      %p157 = pneg %p156
      // Predicated region
      $region9: #{upsample_convt.3} parent=5 // pred_check
        _
      $region10: #{upsample_convt.3} parent=5 // pred_check_branch
        %159 = sbr.rel (%p156) target = $region12
      $region11: #{upsample_convt.3} parent=5 // pred_region
        %s160 = ssub.s32 %s10, 1
        // Predicated region
        $region13: #{upsample_convt.3} parent=11 // pred_check
          %p161 = pneg %p97
        $region14: #{upsample_convt.3} parent=11 // pred_check_branch
          %163 = sbr.rel (%p161) target = $region16
        $region15: #{upsample_convt.3} parent=11 // pred_region
          _
        $region16: #{upsample_convt.3} parent=11 // pred_fallthru
          _
        // Predicated region
        $region17: #{upsample_convt.3} parent=11 // pred_check
          %p164 = pneg %p118
        $region18: #{upsample_convt.3} parent=11 // pred_check_branch
          %166 = sbr.rel (%p164) target = $region20
        $region19: #{upsample_convt.3} parent=11 // pred_region
          _
        $region20: #{upsample_convt.3} parent=11 // pred_fallthru
          _
      $region12: #{upsample_convt.3} parent=5 // pred_fallthru
        _
      %p167 = scmp.lt.s32.totalorder %s10, 8
      // Predicated region
      $region21: #{upsample_convt.3} parent=5 // pred_check
        %p168 = pneg %p167
      $region22: #{upsample_convt.3} parent=5 // pred_check_branch
        %170 = sbr.rel (%p168) target = $region24
      $region23: #{upsample_convt.3} parent=5 // pred_region
        // Predicated region
        $region25: #{upsample_convt.3} parent=23 // pred_check
          %p171 = pneg %p44
        $region26: #{upsample_convt.3} parent=23 // pred_check_branch
          %173 = sbr.rel (%p171) target = $region28
        $region27: #{upsample_convt.3} parent=23 // pred_region
          %s174 = sand.u32 %s34, 1
          %s175 = sand.u32 %s34, 1
          %s176 = smul.addr %s175, 32
          %s177 = scalar_lea.vmem [#allocation2], %s176
          %s178 = smul.u32 2, %s18
          %s179 = smul.addr %s17, 32
          %s180 = sadd.s32 %s178, %s179
          %s181 = smul.addr %s180, 4
          %s182 = scalar_lea.vmem %s0, %s181
          // Predicated region
          $region29: #{upsample_convt.3} parent=27 // pred_check
            _
          $region30: #{upsample_convt.3} parent=27 // pred_check_branch
            %184 = sbr.rel (0) target = $region32
          $region31: #{upsample_convt.3} parent=27 // pred_region
            // Predicated region
            $region33: #{upsample_convt.3} parent=31 // pred_check
              _
            $region34: #{upsample_convt.3} parent=31 // pred_check_branch
              %186 = sbr.rel target = $region36
            $region35: #{upsample_convt.3} parent=31 // pred_region
              // Predicated region
              $region48: #{upsample_convt.3} parent=35 // pred_check
                _
              $region49: #{upsample_convt.3} parent=35 // pred_check_branch
                %215 = sbr.rel (0) target = $region51
              $region50: #{upsample_convt.3} parent=35 // pred_region
                loop: start=0, step=1, limit=1
                $region52: #{upsample_convt.3} parent=50 // loop_pre_header
                  _
                $region53: #{upsample_convt.3} parent=50 // loop_header
                  %s217 = sphi 0, %s221
                  %p218 = scmp.ge.s32.totalorder %s217, 1
                  %s222 = sphi %s182, %s182
                  %s223 = sphi %s177, %s177
                $region54: #{upsample_convt.3} parent=50 // loop_header_branch
                  %220 = sbr.rel (%p218) target = $region58
                $region55: #{upsample_convt.3} parent=50 // loop_body
                  _
                $region56: #{upsample_convt.3} parent=50 // loop_footer
                  %s221 = sadd.s32 1, %s217
                $region57: #{upsample_convt.3} parent=50 // loop_footer_branch
                  %216 = sbr.rel target = $region53
                $region58: #{upsample_convt.3} parent=50 // loop_exit
                  _
                loop: start=0, step=1, limit=1
                $region59: #{upsample_convt.3} parent=50 // loop_pre_header
                  _
                $region60: #{upsample_convt.3} parent=50 // loop_header
                  %s226 = sphi 0, %s230
                  %p227 = scmp.ge.s32.totalorder %s226, 1
                  %s231 = sphi %s182, %s182
                  %s232 = sphi %s177, %s177
                $region61: #{upsample_convt.3} parent=50 // loop_header_branch
                  %229 = sbr.rel (%p227) target = $region65
                $region62: #{upsample_convt.3} parent=50 // loop_body
                  %v233 = vld [vmem:[%s231] sm:$0xf]
                  %234 = vst [vmem:[%s232] sm:$0xf] %v233
                  %v235 = vld [vmem:[%s231 + $0x4] sm:$0xf]
                  %236 = vst [vmem:[%s232 + $0x4] sm:$0xf] %v235
                  %v237 = vld [vmem:[%s231 + $0x20] sm:$0xf]
                  %238 = vst [vmem:[%s232 + $0x8] sm:$0xf] %v237
                  %v239 = vld [vmem:[%s231 + $0x24] sm:$0xf]
                  %240 = vst [vmem:[%s232 + $0xc] sm:$0xf] %v239
                  %v241 = vld [vmem:[%s231 + $0x40] sm:$0xf]
                  %242 = vst [vmem:[%s232 + $0x10] sm:$0xf] %v241
                  %v243 = vld [vmem:[%s231 + $0x44] sm:$0xf]
                  %244 = vst [vmem:[%s232 + $0x14] sm:$0xf] %v243
                  %v245 = vld [vmem:[%s231 + $0x60] sm:$0xf]
                  %246 = vst [vmem:[%s232 + $0x18] sm:$0xf] %v245
                  %v247 = vld [vmem:[%s231 + $0x64] sm:$0xf]
                  %248 = vst [vmem:[%s232 + $0x1c] sm:$0xf] %v247
                $region63: #{upsample_convt.3} parent=50 // loop_footer
                  %s230 = sadd.s32 1, %s226
                $region64: #{upsample_convt.3} parent=50 // loop_footer_branch
                  %225 = sbr.rel target = $region60
                $region65: #{upsample_convt.3} parent=50 // loop_exit
                  _
              $region51: #{upsample_convt.3} parent=35 // pred_fallthru
                _
            $region36: #{upsample_convt.3} parent=31 // pred_fallthru
              _
            // Predicated region
            $region37: #{upsample_convt.3} parent=31 // pred_check
              _
            $region38: #{upsample_convt.3} parent=31 // pred_check_branch
              %188 = sbr.rel (0) target = $region40
            $region39: #{upsample_convt.3} parent=31 // pred_region
              loop: start=0, step=1, limit=1
              $region41: #{upsample_convt.3} parent=39 // loop_pre_header
                _
              $region42: #{upsample_convt.3} parent=39 // loop_header
                %s191 = sphi 0, %s195
                %p192 = scmp.ge.s32.totalorder %s191, 1
                %s196 = sphi %s182, %s182
                %s197 = sphi %s177, %s177
              $region43: #{upsample_convt.3} parent=39 // loop_header_branch
                %194 = sbr.rel (%p192) target = $region47
              $region44: #{upsample_convt.3} parent=39 // loop_body
                %v198 = vld [vmem:[%s196] sm:$0xf]
                %199 = vst [vmem:[%s197] sm:$0xf] %v198
                %v200 = vld [vmem:[%s196 + $0x4] sm:$0xf]
                %201 = vst [vmem:[%s197 + $0x4] sm:$0xf] %v200
                %v202 = vld [vmem:[%s196 + $0x20] sm:$0xf]
                %203 = vst [vmem:[%s197 + $0x8] sm:$0xf] %v202
                %v204 = vld [vmem:[%s196 + $0x24] sm:$0xf]
                %205 = vst [vmem:[%s197 + $0xc] sm:$0xf] %v204
                %v206 = vld [vmem:[%s196 + $0x40] sm:$0xf]
                %207 = vst [vmem:[%s197 + $0x10] sm:$0xf] %v206
                %v208 = vld [vmem:[%s196 + $0x44] sm:$0xf]
                %209 = vst [vmem:[%s197 + $0x14] sm:$0xf] %v208
                %v210 = vld [vmem:[%s196 + $0x60] sm:$0xf]
                %211 = vst [vmem:[%s197 + $0x18] sm:$0xf] %v210
                %v212 = vld [vmem:[%s196 + $0x64] sm:$0xf]
                %213 = vst [vmem:[%s197 + $0x1c] sm:$0xf] %v212
              $region45: #{upsample_convt.3} parent=39 // loop_footer
                %s195 = sadd.s32 1, %s191
              $region46: #{upsample_convt.3} parent=39 // loop_footer_branch
                %190 = sbr.rel target = $region42
              $region47: #{upsample_convt.3} parent=39 // loop_exit
                _
            $region40: #{upsample_convt.3} parent=31 // pred_fallthru
              _
          $region32: #{upsample_convt.3} parent=27 // pred_fallthru
            _
          %249 = vnop
        $region28: #{upsample_convt.3} parent=23 // pred_fallthru
          _
        // Predicated region
        $region66: #{upsample_convt.3} parent=23 // pred_check
          %p250 = pneg %p70
        $region67: #{upsample_convt.3} parent=23 // pred_check_branch
          %252 = sbr.rel (%p250) target = $region69
        $region68: #{upsample_convt.3} parent=23 // pred_region
          %p253 = scmp.lt.s32.totalorder %s17, 1
          %s254 = scalar_select %p253, %s17, 1
          %s255 = smul.addr %s254, 4
          %s256 = smul.addr %s255, 2
          %s257 = scalar_lea.vmem %s1, %s256
        $region69: #{upsample_convt.3} parent=23 // pred_fallthru
          _
      $region24: #{upsample_convt.3} parent=5 // pred_fallthru
        _
      %p258 = scmp.le.s32.totalorder 1, %s10
      %p259 = scmp.lt.s32.totalorder %s10, 9
      %p260 = pnand %p258, %p259
      %p261 = pneg %p260
      // Predicated region
      $region70: #{upsample_convt.3} parent=5 // pred_check
        _
      $region71: #{upsample_convt.3} parent=5 // pred_check_branch
        %263 = sbr.rel (%p260) target = $region73
      $region72: #{upsample_convt.3} parent=5 // pred_region
        %s264 = ssub.s32 %s10, 1
        %s265 = sand.u32 %s37, 1
        %s266 = sand.u32 %s37, 1
        %s267 = smul.addr %s266, 32
        %s268 = scalar_lea.vmem [#allocation2], %s267
        // Predicated region
        $region74: #{upsample_convt.3} parent=72 // pred_check
          %p269 = pneg %p50
        $region75: #{upsample_convt.3} parent=72 // pred_check_branch
          %271 = sbr.rel (%p269) target = $region77
        $region76: #{upsample_convt.3} parent=72 // pred_region
          _
        $region77: #{upsample_convt.3} parent=72 // pred_fallthru
          _
        %s272 = sand.u32 %s37, 1
        %s273 = sand.u32 %s37, 1
        %s274 = smul.addr %s273, 32
        %s275 = scalar_lea.vmem [#allocation2], %s274
        %p276 = pneg %p50
        %p277 = pneg %p47
        %p278 = scmp.lt.s32.totalorder %s19, 1
        %s279 = scalar_select %p278, %s19, 1
        %s280 = smul.addr %s279, 4
        %s281 = smul.addr %s280, 2
        %s282 = scalar_lea.vmem %s1, %s281
        %p283 = pneg %p76
        %p284 = pneg %p73
        %p285 = pneg %p97
        %p286 = pneg %p94
        %p287 = pneg %p118
        %p288 = pneg %p115
        %p289 = pneg %p146
        %p290 = pneg %p143
        %s291 = sand.u32 %s133, 1
        %s292 = sand.u32 %s133, 1
        %s293 = smul.addr %s292, 32
        %s294 = scalar_lea.vmem [#allocation3], %s293
        %s295 = smul.u32 2, %s20
        %p296 = scmp.lt.s32.totalorder %s19, 1
        %s297 = scalar_select %p296, %s19, 1
        %s298 = smul.addr %s297, 4
        %s299 = smul.addr %s298, 2
        %s300 = scalar_lea.vmem %s1, %s299
        %s301 = smul.u32 2, %s20
        %v302 = vld [vmem:[%s300] sm:$0x3]
        %v303 = vld [vmem:[%s300 + $0x2] sm:$0x3]
        %v304 = vld [vmem:[%s300 + $0x4] sm:$0x3]
        %v305 = vld [vmem:[%s300 + $0x6] sm:$0x3]
        %vm306 = vcmask 254976
        %v307 = vsel %vm306, %v302, 0.0
        %v308 = vsel %vm306, %v303, 0.0
        %v309 = vadd.f32 %v307, %v308
        %v310 = vsel %vm306, %v304, 0.0
        %v311 = vadd.f32 %v309, %v310
        %v312 = vsel %vm306, %v305, 0.0
        %v313 = vadd.f32 %v311, %v312
        %v314 = vld [vmem:[%s2] sm:$0xff]
        %v315 = vld [vmem:[%s2 + $0x8] sm:$0xff]
        %v316 = vlaneseq
        %v317 = vshrl.u32 %v316, 7
        %v318 = vsub.s32 0, %v317
        %v319 = vrot.slane %v313, %v318
        %v320 = vmul.f32 %v319, %v314
        %v321 = vmul.f32 %v319, %v315
        %vm322 = vcmask 261120
        %v323 = vsel %vm322, %v320, 0.0
        %324 = vadd.xlane.f32.xlu0 %v323
        %v325 = vpop.xlane.xlu0 %324
        %v326 = vsel %vm322, %v321, 0.0
        %327 = vadd.xlane.f32.xlu0 %v326
        %v328 = vpop.xlane.xlu0 %327
        %v329 = vmul.f32 %v325, 0.001953125
        %v330 = vmul.f32 %v328, 0.001953125
        %v331 = vlaneseq
        %v332 = vshrl.u32 %v331, 7
        %v333 = vsub.s32 1, %v332
        %v334 = vrot.slane %v313, %v333
        %v335 = vmul.f32 %v334, %v314
        %v336 = vmul.f32 %v334, %v315
        %v337 = vsel %vm322, %v335, 0.0
        %338 = vadd.xlane.f32.xlu0 %v337
        %v339 = vpop.xlane.xlu0 %338
        %v340 = vsel %vm322, %v336, 0.0
        %341 = vadd.xlane.f32.xlu0 %v340
        %v342 = vpop.xlane.xlu0 %341
        %v343 = vmul.f32 %v339, 0.001953125
        %v344 = vmul.f32 %v342, 0.001953125
        %v345 = vmul.f32 %v329, %v329
        %v346 = vmul.f32 %v330, %v330
        %v347 = vsub.f32 %v343, %v345
        %v348 = vsub.f32 %v344, %v346
        %v349 = vmax.f32 %v347, 0.0
        %v350 = vmax.f32 %v348, 0.0
        %v351 = vadd.f32 %v349, 1e-06
        %v352 = vadd.f32 %v350, 1e-06
        %v353 = vrsqrt.pop %v351
        %v354 = vrsqrt.pop %v352
        %v355 = vmul.f32 %v329, %v314
        %v356 = vmul.f32 %v330, %v315
        %v357 = vsel %vm322, %v355, 0.0
        %v358 = vsel %vm322, %v356, 0.0
        %v359 = vadd.f32 %v357, %v358
        %v360 = vrot.slane %v359, 4
        %v361 = vadd.f32 %v359, %v360
        %v362 = vrot.slane %v361, 2
        %v363 = vadd.f32 %v361, %v362
        %v364 = vrot.slane %v363, 1
        %v365 = vadd.f32 %v363, %v364
        %v366 = vmul.f32 %v353, %v314
        %v367 = vmul.f32 %v354, %v315
        %v368 = vsel %vm322, %v366, 0.0
        %v369 = vsel %vm322, %v367, 0.0
        %v370 = vadd.f32 %v368, %v369
        %v371 = vrot.slane %v370, 4
        %v372 = vadd.f32 %v370, %v371
        %v373 = vrot.slane %v372, 2
        %v374 = vadd.f32 %v372, %v373
        %v375 = vrot.slane %v374, 1
        %v376 = vadd.f32 %v374, %v375
        %v377 = vld [vmem:[%s3] sm:$0x3]
        %v378 = vmul.f32 %v376, %v377
        %v379 = vmul.f32 %v365, %v378
        %v381 = vrot.slane %v379, 7
        %v383 = vsub.f32 %v377, %v381
        %v384 = vld [vmem:[%s268] sm:$0xf]
        %v385 = vld [vmem:[%s268 + $0x4] sm:$0xf]
        %v386 = vld [vmem:[%s268 + $0x8] sm:$0xf]
        %v387 = vld [vmem:[%s268 + $0xc] sm:$0xf]
        %v388 = vld [vmem:[%s268 + $0x10] sm:$0xf]
        %v389 = vld [vmem:[%s268 + $0x14] sm:$0xf]
        %v390 = vld [vmem:[%s268 + $0x18] sm:$0xf]
        %v391 = vld [vmem:[%s268 + $0x1c] sm:$0xf]
        %v392 = vunpack.c.l.bf16 %v384
        %v393 = vunpack.c.l.bf16 %v385
        %v394 = vunpack.c.l.bf16 %v386
        %v395 = vunpack.c.l.bf16 %v387
        %v396 = vunpack.c.l.bf16 %v388
        %v397 = vunpack.c.l.bf16 %v389
        %v398 = vunpack.c.l.bf16 %v390
        %v399 = vunpack.c.l.bf16 %v391
        %v400 = vlaneseq
        %v401 = vshrl.u32 %v400, 7
        %v402 = vsub.s32 0, %v401
        %v403 = vrot.slane %v378, %v402
        %v404 = vmul.f32 %v392, %v403
        %v405 = vmul.f32 %v393, %v403
        %v406 = vmul.f32 %v394, %v403
        %v407 = vmul.f32 %v395, %v403
        %v408 = vmul.f32 %v396, %v403
        %v409 = vmul.f32 %v397, %v403
        %v410 = vmul.f32 %v398, %v403
        %v411 = vmul.f32 %v399, %v403
        %v412 = vlaneseq
        %v413 = vshrl.u32 %v412, 7
        %v414 = vsub.s32 1, %v413
        %v415 = vrot.slane %v383, %v414
        %v416 = vadd.f32 %v404, %v415
        %v417 = vadd.f32 %v405, %v415
        %v418 = vadd.f32 %v406, %v415
        %v419 = vadd.f32 %v407, %v415
        %v420 = vadd.f32 %v408, %v415
        %v421 = vadd.f32 %v409, %v415
        %v422 = vadd.f32 %v410, %v415
        %v423 = vadd.f32 %v411, %v415
        %v424 = vxor.u32 %v416, 2147483648
        %v425 = vxor.u32 %v417, 2147483648
        %v426 = vxor.u32 %v418, 2147483648
        %v427 = vxor.u32 %v419, 2147483648
        %v428 = vxor.u32 %v420, 2147483648
        %v429 = vxor.u32 %v421, 2147483648
        %v430 = vxor.u32 %v422, 2147483648
        %v431 = vxor.u32 %v423, 2147483648
        %v432 = vmul.f32 %v424, 1.442695
        %v433 = vpow.pop %v432
        %v434 = vmul.f32 %v425, 1.442695
        %v435 = vpow.pop %v434
        %v436 = vmul.f32 %v426, 1.442695
        %v437 = vpow.pop %v436
        %v438 = vmul.f32 %v427, 1.442695
        %v439 = vpow.pop %v438
        %v440 = vmul.f32 %v428, 1.442695
        %v441 = vpow.pop %v440
        %v442 = vmul.f32 %v429, 1.442695
        %v443 = vpow.pop %v442
        %v444 = vmul.f32 %v430, 1.442695
        %v445 = vpow.pop %v444
        %v446 = vmul.f32 %v431, 1.442695
        %v447 = vpow.pop %v446
        %v448 = vadd.f32 %v433, 1.0
        %v449 = vadd.f32 %v435, 1.0
        %v450 = vadd.f32 %v437, 1.0
        %v451 = vadd.f32 %v439, 1.0
        %v452 = vadd.f32 %v441, 1.0
        %v453 = vadd.f32 %v443, 1.0
        %v454 = vadd.f32 %v445, 1.0
        %v455 = vadd.f32 %v447, 1.0
        %v456 = vrcp.pop %v448
        %v457 = vmul.f32 1.0, %v456
        %v458 = vrcp.pop %v449
        %v459 = vmul.f32 1.0, %v458
        %v460 = vrcp.pop %v450
        %v461 = vmul.f32 1.0, %v460
        %v462 = vrcp.pop %v451
        %v463 = vmul.f32 1.0, %v462
        %v464 = vrcp.pop %v452
        %v465 = vmul.f32 1.0, %v464
        %v466 = vrcp.pop %v453
        %v467 = vmul.f32 1.0, %v466
        %v468 = vrcp.pop %v454
        %v469 = vmul.f32 1.0, %v468
        %v470 = vrcp.pop %v455
        %v471 = vmul.f32 1.0, %v470
        %v472 = vmul.f32 %v416, %v457
        %v473 = vmul.f32 %v417, %v459
        %v474 = vmul.f32 %v418, %v461
        %v475 = vmul.f32 %v419, %v463
        %v476 = vmul.f32 %v420, %v465
        %v477 = vmul.f32 %v421, %v467
        %v478 = vmul.f32 %v422, %v469
        %v479 = vmul.f32 %v423, %v471
        %v480 = vpack.c.bf16 %v472, %v472
        %v481 = vpack.c.bf16 %v473, %v473
        %v482 = vpack.c.bf16 %v474, %v474
        %v483 = vpack.c.bf16 %v475, %v475
        %v484 = vpack.c.bf16 %v476, %v476
        %v485 = vpack.c.bf16 %v477, %v477
        %v486 = vpack.c.bf16 %v478, %v478
        %v487 = vpack.c.bf16 %v479, %v479
        %vm488 = vcmask 257024
        %489 = vst.msk [vmem:[%s294] sm:$0xf] %vm488, %v480
        %490 = vst.msk [vmem:[%s294 + $0x4] sm:$0xf] %vm488, %v481
        %491 = vst.msk [vmem:[%s294 + $0x8] sm:$0xf] %vm488, %v482
        %492 = vst.msk [vmem:[%s294 + $0xc] sm:$0xf] %vm488, %v483
        %493 = vst.msk [vmem:[%s294 + $0x10] sm:$0xf] %vm488, %v484
        %494 = vst.msk [vmem:[%s294 + $0x14] sm:$0xf] %vm488, %v485
        %495 = vst.msk [vmem:[%s294 + $0x18] sm:$0xf] %vm488, %v486
        %496 = vst.msk [vmem:[%s294 + $0x1c] sm:$0xf] %vm488, %v487
        %s497 = sand.u32 %s133, 1
        %s498 = sand.u32 %s133, 1
        %s499 = smul.addr %s498, 32
        %s500 = scalar_lea.vmem [#allocation3], %s499
        // Predicated region
        $region78: #{upsample_convt.3} parent=72 // pred_check
          %p501 = pneg %p143
        $region79: #{upsample_convt.3} parent=72 // pred_check_branch
          %503 = sbr.rel (%p501) target = $region81
        $region80: #{upsample_convt.3} parent=72 // pred_region
          %s504 = smul.u32 2, %s20
          %s505 = smul.addr %s19, 32
          %s506 = sadd.s32 %s504, %s505
          %s507 = smul.addr %s506, 4
          %s508 = scalar_lea.vmem %s4, %s507
          // Predicated region
          $region82: #{upsample_convt.3} parent=80 // pred_check
            _
          $region83: #{upsample_convt.3} parent=80 // pred_check_branch
            %510 = sbr.rel (0) target = $region85
          $region84: #{upsample_convt.3} parent=80 // pred_region
            // Predicated region
            $region86: #{upsample_convt.3} parent=84 // pred_check
              _
            $region87: #{upsample_convt.3} parent=84 // pred_check_branch
              %512 = sbr.rel target = $region89
            $region88: #{upsample_convt.3} parent=84 // pred_region
              // Predicated region
              $region101: #{upsample_convt.3} parent=88 // pred_check
                _
              $region102: #{upsample_convt.3} parent=88 // pred_check_branch
                %541 = sbr.rel (0) target = $region104
              $region103: #{upsample_convt.3} parent=88 // pred_region
                loop: start=0, step=1, limit=1
                $region105: #{upsample_convt.3} parent=103 // loop_pre_header
                  _
                $region106: #{upsample_convt.3} parent=103 // loop_header
                  %s543 = sphi 0, %s547
                  %p544 = scmp.ge.s32.totalorder %s543, 1
                  %s548 = sphi %s500, %s500
                  %s549 = sphi %s508, %s508
                $region107: #{upsample_convt.3} parent=103 // loop_header_branch
                  %546 = sbr.rel (%p544) target = $region111
                $region108: #{upsample_convt.3} parent=103 // loop_body
                  _
                $region109: #{upsample_convt.3} parent=103 // loop_footer
                  %s547 = sadd.s32 1, %s543
                $region110: #{upsample_convt.3} parent=103 // loop_footer_branch
                  %542 = sbr.rel target = $region106
                $region111: #{upsample_convt.3} parent=103 // loop_exit
                  _
                loop: start=0, step=1, limit=1
                $region112: #{upsample_convt.3} parent=103 // loop_pre_header
                  _
                $region113: #{upsample_convt.3} parent=103 // loop_header
                  %s552 = sphi 0, %s556
                  %p553 = scmp.ge.s32.totalorder %s552, 1
                  %s557 = sphi %s500, %s500
                  %s558 = sphi %s508, %s508
                $region114: #{upsample_convt.3} parent=103 // loop_header_branch
                  %555 = sbr.rel (%p553) target = $region118
                $region115: #{upsample_convt.3} parent=103 // loop_body
                  %v559 = vld [vmem:[%s557] sm:$0xf]
                  %560 = vst [vmem:[%s558] sm:$0xf] %v559
                  %v561 = vld [vmem:[%s557 + $0x4] sm:$0xf]
                  %562 = vst [vmem:[%s558 + $0x4] sm:$0xf] %v561
                  %v563 = vld [vmem:[%s557 + $0x8] sm:$0xf]
                  %564 = vst [vmem:[%s558 + $0x20] sm:$0xf] %v563
                  %v565 = vld [vmem:[%s557 + $0xc] sm:$0xf]
                  %566 = vst [vmem:[%s558 + $0x24] sm:$0xf] %v565
                  %v567 = vld [vmem:[%s557 + $0x10] sm:$0xf]
                  %568 = vst [vmem:[%s558 + $0x40] sm:$0xf] %v567
                  %v569 = vld [vmem:[%s557 + $0x14] sm:$0xf]
                  %570 = vst [vmem:[%s558 + $0x44] sm:$0xf] %v569
                  %v571 = vld [vmem:[%s557 + $0x18] sm:$0xf]
                  %572 = vst [vmem:[%s558 + $0x60] sm:$0xf] %v571
                  %v573 = vld [vmem:[%s557 + $0x1c] sm:$0xf]
                  %574 = vst [vmem:[%s558 + $0x64] sm:$0xf] %v573
                $region116: #{upsample_convt.3} parent=103 // loop_footer
                  %s556 = sadd.s32 1, %s552
                $region117: #{upsample_convt.3} parent=103 // loop_footer_branch
                  %551 = sbr.rel target = $region113
                $region118: #{upsample_convt.3} parent=103 // loop_exit
                  _
              $region104: #{upsample_convt.3} parent=88 // pred_fallthru
                _
            $region89: #{upsample_convt.3} parent=84 // pred_fallthru
              _
            // Predicated region
            $region90: #{upsample_convt.3} parent=84 // pred_check
              _
            $region91: #{upsample_convt.3} parent=84 // pred_check_branch
              %514 = sbr.rel (0) target = $region93
            $region92: #{upsample_convt.3} parent=84 // pred_region
              loop: start=0, step=1, limit=1
              $region94: #{upsample_convt.3} parent=92 // loop_pre_header
                _
              $region95: #{upsample_convt.3} parent=92 // loop_header
                %s517 = sphi 0, %s521
                %p518 = scmp.ge.s32.totalorder %s517, 1
                %s522 = sphi %s500, %s500
                %s523 = sphi %s508, %s508
              $region96: #{upsample_convt.3} parent=92 // loop_header_branch
                %520 = sbr.rel (%p518) target = $region100
              $region97: #{upsample_convt.3} parent=92 // loop_body
                %v524 = vld [vmem:[%s522] sm:$0xf]
                %525 = vst [vmem:[%s523] sm:$0xf] %v524
                %v526 = vld [vmem:[%s522 + $0x4] sm:$0xf]
                %527 = vst [vmem:[%s523 + $0x4] sm:$0xf] %v526
                %v528 = vld [vmem:[%s522 + $0x8] sm:$0xf]
                %529 = vst [vmem:[%s523 + $0x20] sm:$0xf] %v528
                %v530 = vld [vmem:[%s522 + $0xc] sm:$0xf]
                %531 = vst [vmem:[%s523 + $0x24] sm:$0xf] %v530
                %v532 = vld [vmem:[%s522 + $0x10] sm:$0xf]
                %533 = vst [vmem:[%s523 + $0x40] sm:$0xf] %v532
                %v534 = vld [vmem:[%s522 + $0x14] sm:$0xf]
                %535 = vst [vmem:[%s523 + $0x44] sm:$0xf] %v534
                %v536 = vld [vmem:[%s522 + $0x18] sm:$0xf]
                %537 = vst [vmem:[%s523 + $0x60] sm:$0xf] %v536
                %v538 = vld [vmem:[%s522 + $0x1c] sm:$0xf]
                %539 = vst [vmem:[%s523 + $0x64] sm:$0xf] %v538
              $region98: #{upsample_convt.3} parent=92 // loop_footer
                %s521 = sadd.s32 1, %s517
              $region99: #{upsample_convt.3} parent=92 // loop_footer_branch
                %516 = sbr.rel target = $region95
              $region100: #{upsample_convt.3} parent=92 // loop_exit
                _
            $region93: #{upsample_convt.3} parent=84 // pred_fallthru
              _
          $region85: #{upsample_convt.3} parent=80 // pred_fallthru
            _
          %575 = vnop
        $region81: #{upsample_convt.3} parent=72 // pred_fallthru
          _
      $region73: #{upsample_convt.3} parent=5 // pred_fallthru
        _
      %p576 = scmp.le.s32.totalorder 2, %s10
      // Predicated region
      $region119: #{upsample_convt.3} parent=5 // pred_check
        %p577 = pneg %p576
      $region120: #{upsample_convt.3} parent=5 // pred_check_branch
        %579 = sbr.rel (%p577) target = $region122
      $region121: #{upsample_convt.3} parent=5 // pred_region
        %s580 = ssub.s32 %s10, 2
        // Predicated region
        $region123: #{upsample_convt.3} parent=121 // pred_check
          %p581 = pneg %p149
        $region124: #{upsample_convt.3} parent=121 // pred_check_branch
          %583 = sbr.rel (%p581) target = $region126
        $region125: #{upsample_convt.3} parent=121 // pred_region
          %s584 = sand.u32 %s134, 1
          %s585 = sand.u32 %s134, 1
          %s586 = smul.addr %s585, 32
          %s587 = scalar_lea.vmem [#allocation3], %s586
        $region126: #{upsample_convt.3} parent=121 // pred_fallthru
          _
      $region122: #{upsample_convt.3} parent=5 // pred_fallthru
        _
    $region6: #{upsample_convt.3} parent=1 // loop_footer
      %s14 = sadd.s32 1, %s10
    $region7: #{upsample_convt.3} parent=1 // loop_footer_branch
      %9 = sbr.rel target = $region3
    $region8: #{upsample_convt.3} parent=1 // loop_exit
      _

// kernel: upsample_convt.2
$region0: #{upsample_convt.2}
  #allocation0 [shape = 'u32[]', space=smem, size = 0x4, offset = 0x4, fixed_abs, tag = 'smem constant byte address 0x4 - core index']
  #allocation1 [shape = 'u32[144,128]{1,0:T(1,128)}', space=vmem, size = 0x12000, scoped, tag = 'internal scratch']
  %s0 = inlined_call_operand.vmem [shape: bf16[2,10,10,8], index: 0, kind: input, shape index: {}]
  %s1 = inlined_call_operand.vmem [shape: bf16[16,8,32], index: 1, kind: input, shape index: {}]
  %s2 = inlined_call_operand.vmem [shape: f32[1,32], index: 2, kind: input, shape index: {}]
  %s3 = inlined_call_operand.vmem [shape: bf16[2,4,8,8,32], index: 3, kind: output, shape index: {0}]
  %s4 = inlined_call_operand.vmem [shape: f32[2,4,2,32], index: 4, kind: output, shape index: {1}]
  %5 = xla_tuple %s3, %s4
  %s6 = sld [smem:[#allocation0]]
  $region90: #{upsample_convt.2} parent=0
    _
  %s8 = ssub.s32 1, %s6
  %s9 = scalar_select 0, %s8, %s6
  $region1: #{upsample_convt.2} parent=0
    #allocation2 [shape = 'u8[32768]{0}', space=vmem, size = 0x8000, scoped, tag = 'output window, operand 0']
    loop: start=0, step=1, limit=10
    $region2: #{upsample_convt.2} parent=1 // loop_pre_header
      _
    $region3: #{upsample_convt.2} parent=1 // loop_header
      %s11 = sphi 0, %s15
      %p12 = scmp.ge.s32.totalorder %s11, 10
      %s18 = sphi 0, %s30
      %s19 = sphi 0, %s26
      %s20 = sphi 0, %s18
      %s21 = sphi 0, %s19
      %s22 = sphi 0, %s20
      %s23 = sphi 0, %s21
      %s33 = sphi 0, %s35
      %s36 = sphi 0, %s33
      %s37 = sphi 0, %s36
      %s53 = sphi 0, %s37
      %s57 = sphi 0, %s57
      %s59 = sphi 0, %s57
      %s60 = sphi 0, %s59
      %s74 = sphi 0, %s60
      %s78 = sphi 0, %s78
      %s80 = sphi 0, %s78
      %s81 = sphi 0, %s80
      %s95 = sphi 0, %s81
      %s103 = sphi 0, %s105
      %s106 = sphi 0, %s103
      %s107 = sphi 0, %s106
      %s123 = sphi 0, %s107
      %s131 = sphi 0, %s133
      %s134 = sphi 0, %s131
      %s135 = sphi 0, %s134
      %s151 = sphi 0, %s135
    $region4: #{upsample_convt.2} parent=1 // loop_header_branch
      %14 = sbr.rel (%p12) target = $region8
    $region5: #{upsample_convt.2} parent=1 // loop_body
      %s16 = ssub.s32 %s11, 1
      %s17 = ssub.s32 %s11, 2
      %s24 = sadd.s32 1, %s19
      %p25 = scmp.ge.s32.totalorder %s24, 4
      %s26 = scalar_select %p25, 0, %s24
      %s27 = sadd.s32 1, %s18
      %s28 = scalar_select %p25, %s27, %s18
      %p29 = scmp.ge.s32.totalorder %s28, 2
      %s30 = scalar_select %p29, 0, %s28
      %s31 = ssub.s32 %s18, %s30
      %p32 = scmp.eq.s32.totalorder %s31, 0
      %s34 = sadd.s32 %s33, 1
      %s35 = scalar_select %p32, %s33, %s34
      %p38 = pneg %p32
      %p39 = scmp.eq.s32.totalorder %s11, 7
      %p40 = por %p38, %p39
      %p41 = scmp.ne.s32.totalorder %s33, %s36
      %p42 = scmp.eq.s32.totalorder %s11, 0
      %p43 = por %p41, %p42
      %p44 = scmp.ne.s32.totalorder %s33, %s36
      %p45 = scmp.eq.s32.totalorder %s16, 7
      %p46 = por %p44, %p45
      %p47 = scmp.ne.s32.totalorder %s36, %s37
      %p48 = scmp.eq.s32.totalorder %s16, 0
      %p49 = por %p47, %p48
      %p50 = scmp.ne.s32.totalorder %s36, %s37
      %p51 = scmp.eq.s32.totalorder %s17, 7
      %p52 = por %p50, %p51
      %p54 = scmp.ne.s32.totalorder %s37, %s53
      %p55 = scmp.eq.s32.totalorder %s17, 0
      %p56 = por %p54, %p55
      %s58 = sadd.s32 %s57, 1
      %p61 = scmp.eq.s32.totalorder %s11, 7
      %p62 = scmp.ne.s32.totalorder %s57, %s59
      %p63 = scmp.eq.s32.totalorder %s11, 0
      %p64 = por %p62, %p63
      %p65 = scmp.ne.s32.totalorder %s57, %s59
      %p66 = scmp.eq.s32.totalorder %s16, 7
      %p67 = por %p65, %p66
      %p68 = scmp.ne.s32.totalorder %s59, %s60
      %p69 = scmp.eq.s32.totalorder %s16, 0
      %p70 = por %p68, %p69
      %p71 = scmp.ne.s32.totalorder %s59, %s60
      %p72 = scmp.eq.s32.totalorder %s17, 7
      %p73 = por %p71, %p72
      %p75 = scmp.ne.s32.totalorder %s60, %s74
      %p76 = scmp.eq.s32.totalorder %s17, 0
      %p77 = por %p75, %p76
      %s79 = sadd.s32 %s78, 1
      %p82 = scmp.eq.s32.totalorder %s11, 7
      %p83 = scmp.ne.s32.totalorder %s78, %s80
      %p84 = scmp.eq.s32.totalorder %s11, 0
      %p85 = por %p83, %p84
      %p86 = scmp.ne.s32.totalorder %s78, %s80
      %p87 = scmp.eq.s32.totalorder %s16, 7
      %p88 = por %p86, %p87
      %p89 = scmp.ne.s32.totalorder %s80, %s81
      %p90 = scmp.eq.s32.totalorder %s16, 0
      %p91 = por %p89, %p90
      %p92 = scmp.ne.s32.totalorder %s80, %s81
      %p93 = scmp.eq.s32.totalorder %s17, 7
      %p94 = por %p92, %p93
      %p96 = scmp.ne.s32.totalorder %s81, %s95
      %p97 = scmp.eq.s32.totalorder %s17, 0
      %p98 = por %p96, %p97
      %s99 = ssub.s32 %s18, %s30
      %s100 = ssub.s32 %s19, %s26
      %s101 = sor.u32 %s99, %s100
      %p102 = scmp.eq.s32.totalorder %s101, 0
      %s104 = sadd.s32 %s103, 1
      %s105 = scalar_select %p102, %s103, %s104
      %p108 = pneg %p102
      %p109 = scmp.eq.s32.totalorder %s11, 7
      %p110 = por %p108, %p109
      %p111 = scmp.ne.s32.totalorder %s103, %s106
      %p112 = scmp.eq.s32.totalorder %s11, 0
      %p113 = por %p111, %p112
      %p114 = scmp.ne.s32.totalorder %s103, %s106
      %p115 = scmp.eq.s32.totalorder %s16, 7
      %p116 = por %p114, %p115
      %p117 = scmp.ne.s32.totalorder %s106, %s107
      %p118 = scmp.eq.s32.totalorder %s16, 0
      %p119 = por %p117, %p118
      %p120 = scmp.ne.s32.totalorder %s106, %s107
      %p121 = scmp.eq.s32.totalorder %s17, 7
      %p122 = por %p120, %p121
      %p124 = scmp.ne.s32.totalorder %s107, %s123
      %p125 = scmp.eq.s32.totalorder %s17, 0
      %p126 = por %p124, %p125
      %s127 = ssub.s32 %s18, %s30
      %s128 = ssub.s32 %s19, %s26
      %s129 = sor.u32 %s127, %s128
      %p130 = scmp.eq.s32.totalorder %s129, 0
      %s132 = sadd.s32 %s131, 1
      %s133 = scalar_select %p130, %s131, %s132
      %p136 = pneg %p130
      %p137 = scmp.eq.s32.totalorder %s11, 7
      %p138 = por %p136, %p137
      %p139 = scmp.ne.s32.totalorder %s131, %s134
      %p140 = scmp.eq.s32.totalorder %s11, 0
      %p141 = por %p139, %p140
      %p142 = scmp.ne.s32.totalorder %s131, %s134
      %p143 = scmp.eq.s32.totalorder %s16, 7
      %p144 = por %p142, %p143
      %p145 = scmp.ne.s32.totalorder %s134, %s135
      %p146 = scmp.eq.s32.totalorder %s16, 0
      %p147 = por %p145, %p146
      %p148 = scmp.ne.s32.totalorder %s134, %s135
      %p149 = scmp.eq.s32.totalorder %s17, 7
      %p150 = por %p148, %p149
      %p152 = scmp.ne.s32.totalorder %s135, %s151
      %p153 = scmp.eq.s32.totalorder %s17, 0
      %p154 = por %p152, %p153
      %p155 = scmp.le.s32.totalorder 1, %s11
      %p156 = scmp.lt.s32.totalorder %s11, 9
      %p157 = pnand %p155, %p156
      %p158 = pneg %p157
      // Predicated region
      $region9: #{upsample_convt.2} parent=5 // pred_check
        _
      $region10: #{upsample_convt.2} parent=5 // pred_check_branch
        %160 = sbr.rel (%p157) target = $region12
      $region11: #{upsample_convt.2} parent=5 // pred_region
        %s161 = ssub.s32 %s11, 1
        // Predicated region
        $region13: #{upsample_convt.2} parent=11 // pred_check
          %p162 = pneg %p70
        $region14: #{upsample_convt.2} parent=11 // pred_check_branch
          %164 = sbr.rel (%p162) target = $region16
        $region15: #{upsample_convt.2} parent=11 // pred_region
          _
        $region16: #{upsample_convt.2} parent=11 // pred_fallthru
          _
        // Predicated region
        $region17: #{upsample_convt.2} parent=11 // pred_check
          %p165 = pneg %p91
        $region18: #{upsample_convt.2} parent=11 // pred_check_branch
          %167 = sbr.rel (%p165) target = $region20
        $region19: #{upsample_convt.2} parent=11 // pred_region
          _
        $region20: #{upsample_convt.2} parent=11 // pred_fallthru
          _
      $region12: #{upsample_convt.2} parent=5 // pred_fallthru
        _
      %p168 = scmp.lt.s32.totalorder %s11, 8
      // Predicated region
      $region21: #{upsample_convt.2} parent=5 // pred_check
        %p169 = pneg %p168
      $region22: #{upsample_convt.2} parent=5 // pred_check_branch
        %171 = sbr.rel (%p169) target = $region24
      $region23: #{upsample_convt.2} parent=5 // pred_region
        // Predicated region
        $region25: #{upsample_convt.2} parent=23 // pred_check
          %p172 = pneg %p43
        $region26: #{upsample_convt.2} parent=23 // pred_check_branch
          %174 = sbr.rel (%p172) target = $region28
        $region27: #{upsample_convt.2} parent=23 // pred_region
          %p175 = scmp.lt.s32.totalorder %s18, 1
          %s176 = scalar_select %p175, %s18, 1
          %s177 = smul.addr %s176, 20
          %s178 = smul.addr %s177, 4
          %s179 = scalar_lea.vmem %s0, %s178
        $region28: #{upsample_convt.2} parent=23 // pred_fallthru
          _
      $region24: #{upsample_convt.2} parent=5 // pred_fallthru
        _
      %p180 = scmp.le.s32.totalorder 1, %s11
      %p181 = scmp.lt.s32.totalorder %s11, 9
      %p182 = pnand %p180, %p181
      %p183 = pneg %p182
      // Predicated region
      $region29: #{upsample_convt.2} parent=5 // pred_check
        _
      $region30: #{upsample_convt.2} parent=5 // pred_check_branch
        %185 = sbr.rel (%p182) target = $region32
      $region31: #{upsample_convt.2} parent=5 // pred_region
        %s186 = ssub.s32 %s11, 1
        %p187 = scmp.lt.s32.totalorder %s20, 1
        %s188 = scalar_select %p187, %s20, 1
        %s189 = smul.addr %s188, 20
        %s190 = smul.addr %s189, 4
        %s191 = scalar_lea.vmem %s0, %s190
        %p192 = pneg %p49
        %p193 = pneg %p46
        %p194 = pneg %p70
        %p195 = pneg %p67
        %p196 = pneg %p91
        %p197 = pneg %p88
        %p198 = pneg %p119
        %p199 = pneg %p116
        %s200 = sand.u32 %s106, 1
        %s201 = sand.u32 %s106, 1
        %s202 = smul.addr %s201, 32
        %s203 = scalar_lea.vmem [#allocation2], %s202
        %p204 = pneg %p147
        %p205 = pneg %p144
        %p206 = scmp.lt.s32.totalorder %s20, 1
        %s207 = scalar_select %p206, %s20, 1
        %p208 = scmp.lt.s32.totalorder %s21, 3
        %s209 = scalar_select %p208, %s21, 3
        %s210 = smul.addr %s207, 4
        %s211 = sadd.s32 %s209, %s210
        %s212 = smul.addr %s211, 2
        %s213 = scalar_lea.vmem %s4, %s212
        %p214 = scmp.lt.s32.totalorder %s20, 1
        %s215 = scalar_select %p214, %s20, 1
        %s216 = smul.addr %s215, 20
        %s217 = smul.addr %s216, 4
        %s218 = scalar_lea.vmem %s0, %s217
        %s219 = smul.u32 2, %s21
        %p220 = scmp.lt.s32.totalorder %s20, 1
        %s221 = scalar_select %p220, %s20, 1
        %p222 = scmp.lt.s32.totalorder %s21, 3
        %s223 = scalar_select %p222, %s21, 3
        %s224 = smul.addr %s221, 4
        %s225 = sadd.s32 %s223, %s224
        %s226 = smul.addr %s225, 2
        %s227 = scalar_lea.vmem %s4, %s226
        %s229 = smul.u32 %s21, 2
        %v230 = vld [vmem:[%s2] sm:$0x1]
        %s231 = smul.u32 %s229, 2
        %s232 = smul.addr %s231, 4
        %s233 = scalar_lea.vmem %s218, %s232
        %v234 = vld [vmem:[%s233] sm:$0xf]
        %v235 = vld [vmem:[%s233 + $0x8] sm:$0xf]
        %v236 = vld [vmem:[%s1] sm:$0xf]
        %v237 = vld [vmem:[%s233 + $0x4] sm:$0x1]
        %v238 = vld [vmem:[%s233 + $0xc] sm:$0x1]
        %vm239 = vsmask.f32 3328
        %vm240 = vsmask.f32 7440
        %vm241 = vmor %vm239, %vm240
        %v243 = vshrl.u32 %v234, 16
        %v245 = vrot.slane %v243, 4
        %v246 = vshll.u32 %v234, 16
        %v248 = vrot.slane %v246, 5
        %v249 = vor.u32 %v245, %v248
        %v250 = vrot.slane %v249, 4
        %v252 = vshll.u32 %v237, 16
        %v254 = vrot.slane %v252, 5
        %v255 = vsel %vm241, %v250, %v254
        %v257 = vshrl.u32 %v235, 16
        %v259 = vrot.slane %v257, 4
        %v260 = vshll.u32 %v235, 16
        %v262 = vrot.slane %v260, 5
        %v263 = vor.u32 %v259, %v262
        %v264 = vrot.slane %v263, 4
        %v266 = vshll.u32 %v238, 16
        %v268 = vrot.slane %v266, 5
        %v269 = vsel %vm241, %v264, %v268
        %s270 = scalar_lea.vmem %s1, 4
        %v271 = vld [vmem:[%s270] sm:$0xf]
        %v272 = vunpack.c.l.b16 %v255
        %v273 = vunpack.c.l.b16 %v269
        %v274 = vpack.c.b16 %v273, %v272
        %vm275 = vcmask 64512
        %v277 = vsel %vm275, %v274, 0
        %vm279 = vcmask 1043456
        %v281 = vsel %vm279, %v271, 0
        %283 = vmatprep.subr.bf16.mxu0 0
        %284 = vmatpush1.bf16.msra.mxu0 %v281
        %285 = vmatprep.subr.bf16.mxu0 0
        %286 = vmatpush1.bf16.msra.mxu0 0
        %287 = vmatprep.subr.bf16.mxu0 0
        %288 = vmatpush1.bf16.msra.mxu0 0
        %289 = vmatprep.subr.bf16.mxu0 0
        %290 = vmatpush1.bf16.msra.mxu0 0
        %291 = vmatprep.subr.bf16.mxu0 0
        %292 = vmatpush1.bf16.msra.mxu0 0
        %293 = vmatprep.subr.bf16.mxu0 0
        %294 = vmatpush1.bf16.msra.mxu0 0
        %295 = vmatprep.subr.bf16.mxu0 0
        %296 = vmatpush1.bf16.msra.mxu0 0
        %297 = vmatprep.subr.bf16.mxu0 0
        %298 = vmatpush1.bf16.msra.mxu0 0
        %299 = vmatprep.subr.bf16.mxu0 0
        %300 = vmatpush1.bf16.msra.mxu0 0
        %301 = vmatprep.subr.bf16.mxu0 0
        %302 = vmatpush1.bf16.msra.mxu0 0
        %303 = vmatprep.subr.bf16.mxu0 0
        %304 = vmatpush1.bf16.msra.mxu0 0
        %305 = vmatprep.subr.bf16.mxu0 0
        %306 = vmatpush1.bf16.msra.mxu0 0
        %307 = vmatprep.subr.bf16.mxu0 0
        %308 = vmatpush1.bf16.msra.mxu0 0
        %309 = vmatprep.subr.bf16.mxu0 0
        %310 = vmatpush1.bf16.msra.mxu0 0
        %311 = vmatprep.subr.bf16.mxu0 0
        %312 = vmatpush1.bf16.msra.mxu0 0
        %313 = vmatprep.subr.bf16.mxu0 0
        %314 = vmatpush1.bf16.msra.mxu0 0
        %315 = vmatprep.mubr.bf16.mxu0 0
        %316 = vmatmul.mubr.bf16.gmra.mrb[0].mxu0 %v277
        %v317 = vpop.f32.mrb[0].mxu0
        %v318 = vadd.f32 0.0, %v317
        %v319 = vpop.f32.mrb[0].mxu0
        %v320 = vpop.f32.mrb[0].mxu0
        %v321 = vadd.f32 0.0, %v320
        %v322 = vpop.f32.mrb[0].mxu0
        %323 = vdwg.mxu0
        %v326 = vunpack.c.l.b16 %v234
        %v327 = vunpack.c.l.b16 %v235
        %v328 = vpack.c.b16 %v327, %v326
        %v330 = vsel %vm275, %v328, 0
        %v333 = vsel %vm279, %v236, 0
        %335 = vmatprep.subr.bf16.mxu0 0
        %336 = vmatpush1.bf16.msra.mxu0 %v333
        %337 = vmatprep.subr.bf16.mxu0 0
        %338 = vmatpush1.bf16.msra.mxu0 0
        %339 = vmatprep.subr.bf16.mxu0 0
        %340 = vmatpush1.bf16.msra.mxu0 0
        %341 = vmatprep.subr.bf16.mxu0 0
        %342 = vmatpush1.bf16.msra.mxu0 0
        %343 = vmatprep.subr.bf16.mxu0 0
        %344 = vmatpush1.bf16.msra.mxu0 0
        %345 = vmatprep.subr.bf16.mxu0 0
        %346 = vmatpush1.bf16.msra.mxu0 0
        %347 = vmatprep.subr.bf16.mxu0 0
        %348 = vmatpush1.bf16.msra.mxu0 0
        %349 = vmatprep.subr.bf16.mxu0 0
        %350 = vmatpush1.bf16.msra.mxu0 0
        %351 = vmatprep.subr.bf16.mxu0 0
        %352 = vmatpush1.bf16.msra.mxu0 0
        %353 = vmatprep.subr.bf16.mxu0 0
        %354 = vmatpush1.bf16.msra.mxu0 0
        %355 = vmatprep.subr.bf16.mxu0 0
        %356 = vmatpush1.bf16.msra.mxu0 0
        %357 = vmatprep.subr.bf16.mxu0 0
        %358 = vmatpush1.bf16.msra.mxu0 0
        %359 = vmatprep.subr.bf16.mxu0 0
        %360 = vmatpush1.bf16.msra.mxu0 0
        %361 = vmatprep.subr.bf16.mxu0 0
        %362 = vmatpush1.bf16.msra.mxu0 0
        %363 = vmatprep.subr.bf16.mxu0 0
        %364 = vmatpush1.bf16.msra.mxu0 0
        %365 = vmatprep.subr.bf16.mxu0 0
        %366 = vmatpush1.bf16.msra.mxu0 0
        %367 = vmatprep.mubr.bf16.mxu0 0
        %368 = vmatmul.mubr.bf16.gmra.mrb[0].mxu0 %v330
        %v369 = vpop.f32.mrb[0].mxu0
        %v370 = vadd.f32 %v318, %v369
        %v371 = vpop.f32.mrb[0].mxu0
        %v372 = vpop.f32.mrb[0].mxu0
        %v373 = vadd.f32 %v321, %v372
        %v374 = vpop.f32.mrb[0].mxu0
        %375 = vdwg.mxu0
        %s376 = sadd.s32 %s229, 1
        %s377 = smul.u32 %s376, 2
        %s378 = smul.addr %s377, 4
        %s379 = scalar_lea.vmem %s218, %s378
        %v380 = vld [vmem:[%s379] sm:$0xf]
        %v381 = vld [vmem:[%s379 + $0x8] sm:$0xf]
        %s382 = scalar_lea.vmem %s1, 8
        %v383 = vld [vmem:[%s382] sm:$0xf]
        %v386 = vunpack.c.l.b16 %v380
        %v387 = vunpack.c.l.b16 %v381
        %v388 = vpack.c.b16 %v387, %v386
        %v390 = vsel %vm275, %v388, 0
        %v393 = vsel %vm279, %v383, 0
        %395 = vmatprep.subr.bf16.mxu0 0
        %396 = vmatpush1.bf16.msra.mxu0 %v393
        %397 = vmatprep.subr.bf16.mxu0 0
        %398 = vmatpush1.bf16.msra.mxu0 0
        %399 = vmatprep.subr.bf16.mxu0 0
        %400 = vmatpush1.bf16.msra.mxu0 0
        %401 = vmatprep.subr.bf16.mxu0 0
        %402 = vmatpush1.bf16.msra.mxu0 0
        %403 = vmatprep.subr.bf16.mxu0 0
        %404 = vmatpush1.bf16.msra.mxu0 0
        %405 = vmatprep.subr.bf16.mxu0 0
        %406 = vmatpush1.bf16.msra.mxu0 0
        %407 = vmatprep.subr.bf16.mxu0 0
        %408 = vmatpush1.bf16.msra.mxu0 0
        %409 = vmatprep.subr.bf16.mxu0 0
        %410 = vmatpush1.bf16.msra.mxu0 0
        %411 = vmatprep.subr.bf16.mxu0 0
        %412 = vmatpush1.bf16.msra.mxu0 0
        %413 = vmatprep.subr.bf16.mxu0 0
        %414 = vmatpush1.bf16.msra.mxu0 0
        %415 = vmatprep.subr.bf16.mxu0 0
        %416 = vmatpush1.bf16.msra.mxu0 0
        %417 = vmatprep.subr.bf16.mxu0 0
        %418 = vmatpush1.bf16.msra.mxu0 0
        %419 = vmatprep.subr.bf16.mxu0 0
        %420 = vmatpush1.bf16.msra.mxu0 0
        %421 = vmatprep.subr.bf16.mxu0 0
        %422 = vmatpush1.bf16.msra.mxu0 0
        %423 = vmatprep.subr.bf16.mxu0 0
        %424 = vmatpush1.bf16.msra.mxu0 0
        %425 = vmatprep.subr.bf16.mxu0 0
        %426 = vmatpush1.bf16.msra.mxu0 0
        %427 = vmatprep.mubr.bf16.mxu0 0
        %428 = vmatmul.mubr.bf16.gmra.mrb[0].mxu0 %v390
        %v429 = vpop.f32.mrb[0].mxu0
        %v430 = vadd.f32 0.0, %v429
        %v431 = vpop.f32.mrb[0].mxu0
        %v432 = vpop.f32.mrb[0].mxu0
        %v433 = vadd.f32 0.0, %v432
        %v434 = vpop.f32.mrb[0].mxu0
        %435 = vdwg.mxu0
        %v436 = vadd.f32 %v370, %v430
        %v437 = vadd.f32 %v373, %v433
        %v438 = vld [vmem:[%s379] sm:$0xf]
        %v439 = vld [vmem:[%s379 + $0x4] sm:$0x1]
        %v440 = vld [vmem:[%s379 + $0x8] sm:$0xf]
        %v441 = vld [vmem:[%s379 + $0xc] sm:$0x1]
        %v443 = vshrl.u32 %v438, 16
        %v445 = vrot.slane %v443, 4
        %v446 = vshll.u32 %v438, 16
        %v448 = vrot.slane %v446, 5
        %v449 = vor.u32 %v445, %v448
        %v450 = vrot.slane %v449, 4
        %v452 = vshll.u32 %v439, 16
        %v454 = vrot.slane %v452, 5
        %v455 = vsel %vm241, %v450, %v454
        %v457 = vshrl.u32 %v440, 16
        %v459 = vrot.slane %v457, 4
        %v460 = vshll.u32 %v440, 16
        %v462 = vrot.slane %v460, 5
        %v463 = vor.u32 %v459, %v462
        %v464 = vrot.slane %v463, 4
        %v466 = vshll.u32 %v441, 16
        %v468 = vrot.slane %v466, 5
        %v469 = vsel %vm241, %v464, %v468
        %s470 = scalar_lea.vmem %s1, 12
        %v471 = vld [vmem:[%s470] sm:$0xf]
        %v472 = vunpack.c.l.b16 %v455
        %v473 = vunpack.c.l.b16 %v469
        %v474 = vpack.c.b16 %v473, %v472
        %v476 = vsel %vm275, %v474, 0
        %v479 = vsel %vm279, %v471, 0
        %481 = vmatprep.subr.bf16.mxu0 0
        %482 = vmatpush1.bf16.msra.mxu0 %v479
        %483 = vmatprep.subr.bf16.mxu0 0
        %484 = vmatpush1.bf16.msra.mxu0 0
        %485 = vmatprep.subr.bf16.mxu0 0
        %486 = vmatpush1.bf16.msra.mxu0 0
        %487 = vmatprep.subr.bf16.mxu0 0
        %488 = vmatpush1.bf16.msra.mxu0 0
        %489 = vmatprep.subr.bf16.mxu0 0
        %490 = vmatpush1.bf16.msra.mxu0 0
        %491 = vmatprep.subr.bf16.mxu0 0
        %492 = vmatpush1.bf16.msra.mxu0 0
        %493 = vmatprep.subr.bf16.mxu0 0
        %494 = vmatpush1.bf16.msra.mxu0 0
        %495 = vmatprep.subr.bf16.mxu0 0
        %496 = vmatpush1.bf16.msra.mxu0 0
        %497 = vmatprep.subr.bf16.mxu0 0
        %498 = vmatpush1.bf16.msra.mxu0 0
        %499 = vmatprep.subr.bf16.mxu0 0
        %500 = vmatpush1.bf16.msra.mxu0 0
        %501 = vmatprep.subr.bf16.mxu0 0
        %502 = vmatpush1.bf16.msra.mxu0 0
        %503 = vmatprep.subr.bf16.mxu0 0
        %504 = vmatpush1.bf16.msra.mxu0 0
        %505 = vmatprep.subr.bf16.mxu0 0
        %506 = vmatpush1.bf16.msra.mxu0 0
        %507 = vmatprep.subr.bf16.mxu0 0
        %508 = vmatpush1.bf16.msra.mxu0 0
        %509 = vmatprep.subr.bf16.mxu0 0
        %510 = vmatpush1.bf16.msra.mxu0 0
        %511 = vmatprep.subr.bf16.mxu0 0
        %512 = vmatpush1.bf16.msra.mxu0 0
        %513 = vmatprep.mubr.bf16.mxu0 0
        %514 = vmatmul.mubr.bf16.gmra.mrb[0].mxu0 %v476
        %v515 = vpop.f32.mrb[0].mxu0
        %v516 = vadd.f32 0.0, %v515
        %v517 = vpop.f32.mrb[0].mxu0
        %v518 = vpop.f32.mrb[0].mxu0
        %v519 = vadd.f32 0.0, %v518
        %v520 = vpop.f32.mrb[0].mxu0
        %521 = vdwg.mxu0
        %v522 = vadd.f32 %v436, %v516
        %v523 = vadd.f32 %v437, %v519
        %v525 = vlaneseq
        %v526 = vshrl.u32 %v525, 7
        %v527 = vsub.s32 0, %v526
        %v528 = vrot.slane %v230, %v527
        %v530 = vadd.f32 %v522, %v528
        %v531 = vadd.f32 %v523, %v528
        %v532 = vpack.c.bf16 %v531, %v530
        %v533 = vunpack.c.l.bf16 %v532
        %v534 = vunpack.c.h.bf16 %v532
        %vm535 = vcmask 261120
        %v536 = vsel %vm535, %v533, 0.0
        %v537 = vsel %vm535, %v534, 0.0
        %v538 = vadd.f32 %v536, %v537
        %v539 = vrot.slane %v538, 4
        %v540 = vadd.f32 %v538, %v539
        %v541 = vrot.slane %v540, 2
        %v542 = vadd.f32 %v540, %v541
        %v543 = vrot.slane %v542, 1
        %v544 = vadd.f32 %v542, %v543
        %v545 = vadd.f32 %v544, 0.0
        %v546 = vmul.f32 %v533, %v533
        %v547 = vmul.f32 %v534, %v534
        %v548 = vsel %vm535, %v546, 0.0
        %v549 = vsel %vm535, %v547, 0.0
        %v550 = vadd.f32 %v548, %v549
        %v551 = vrot.slane %v550, 4
        %v552 = vadd.f32 %v550, %v551
        %v553 = vrot.slane %v552, 2
        %v554 = vadd.f32 %v552, %v553
        %v555 = vrot.slane %v554, 1
        %v556 = vadd.f32 %v554, %v555
        %v557 = vadd.f32 %v556, 0.0
        %s558 = scalar_lea.vmem %s1, 16
        %v559 = vld [vmem:[%s558] sm:$0xf]
        %v560 = vld [vmem:[%s233] sm:$0xe]
        %v561 = vld [vmem:[%s233 + $0x8] sm:$0xe]
        %vm566 = vcmask 1042432
        %vm567 = vcmask 1046532
        %vm568 = vmor %vm566, %vm567
        %v569 = vrot.slane %v560, 5
        %v570 = vrot.slane %v569, 4
        %v571 = vrot.slane %v237, 5
        %v572 = vsel %vm568, %v570, %v571
        %v573 = vrot.slane %v561, 5
        %v574 = vrot.slane %v573, 4
        %v575 = vrot.slane %v238, 5
        %v576 = vsel %vm568, %v574, %v575
        %s577 = scalar_lea.vmem %s1, 20
        %v578 = vld [vmem:[%s577] sm:$0xf]
        %v579 = vunpack.c.l.b16 %v572
        %v580 = vunpack.c.l.b16 %v576
        %v581 = vpack.c.b16 %v580, %v579
        %v583 = vsel %vm275, %v581, 0
        %v586 = vsel %vm279, %v578, 0
        %588 = vmatprep.subr.bf16.mxu0 0
        %589 = vmatpush1.bf16.msra.mxu0 %v586
        %590 = vmatprep.subr.bf16.mxu0 0
        %591 = vmatpush1.bf16.msra.mxu0 0
        %592 = vmatprep.subr.bf16.mxu0 0
        %593 = vmatpush1.bf16.msra.mxu0 0
        %594 = vmatprep.subr.bf16.mxu0 0
        %595 = vmatpush1.bf16.msra.mxu0 0
        %596 = vmatprep.subr.bf16.mxu0 0
        %597 = vmatpush1.bf16.msra.mxu0 0
        %598 = vmatprep.subr.bf16.mxu0 0
        %599 = vmatpush1.bf16.msra.mxu0 0
        %600 = vmatprep.subr.bf16.mxu0 0
        %601 = vmatpush1.bf16.msra.mxu0 0
        %602 = vmatprep.subr.bf16.mxu0 0
        %603 = vmatpush1.bf16.msra.mxu0 0
        %604 = vmatprep.subr.bf16.mxu0 0
        %605 = vmatpush1.bf16.msra.mxu0 0
        %606 = vmatprep.subr.bf16.mxu0 0
        %607 = vmatpush1.bf16.msra.mxu0 0
        %608 = vmatprep.subr.bf16.mxu0 0
        %609 = vmatpush1.bf16.msra.mxu0 0
        %610 = vmatprep.subr.bf16.mxu0 0
        %611 = vmatpush1.bf16.msra.mxu0 0
        %612 = vmatprep.subr.bf16.mxu0 0
        %613 = vmatpush1.bf16.msra.mxu0 0
        %614 = vmatprep.subr.bf16.mxu0 0
        %615 = vmatpush1.bf16.msra.mxu0 0
        %616 = vmatprep.subr.bf16.mxu0 0
        %617 = vmatpush1.bf16.msra.mxu0 0
        %618 = vmatprep.subr.bf16.mxu0 0
        %619 = vmatpush1.bf16.msra.mxu0 0
        %620 = vmatprep.mubr.bf16.mxu0 0
        %621 = vmatmul.mubr.bf16.gmra.mrb[0].mxu0 %v583
        %v622 = vpop.f32.mrb[0].mxu0
        %v623 = vadd.f32 0.0, %v622
        %v624 = vpop.f32.mrb[0].mxu0
        %v625 = vpop.f32.mrb[0].mxu0
        %v626 = vadd.f32 0.0, %v625
        %v627 = vpop.f32.mrb[0].mxu0
        %628 = vdwg.mxu0
        %v630 = vsel %vm279, %v559, 0
        %632 = vmatprep.subr.bf16.mxu0 0
        %633 = vmatpush1.bf16.msra.mxu0 %v630
        %634 = vmatprep.subr.bf16.mxu0 0
        %635 = vmatpush1.bf16.msra.mxu0 0
        %636 = vmatprep.subr.bf16.mxu0 0
        %637 = vmatpush1.bf16.msra.mxu0 0
        %638 = vmatprep.subr.bf16.mxu0 0
        %639 = vmatpush1.bf16.msra.mxu0 0
        %640 = vmatprep.subr.bf16.mxu0 0
        %641 = vmatpush1.bf16.msra.mxu0 0
        %642 = vmatprep.subr.bf16.mxu0 0
        %643 = vmatpush1.bf16.msra.mxu0 0
        %644 = vmatprep.subr.bf16.mxu0 0
        %645 = vmatpush1.bf16.msra.mxu0 0
        %646 = vmatprep.subr.bf16.mxu0 0
        %647 = vmatpush1.bf16.msra.mxu0 0
        %648 = vmatprep.subr.bf16.mxu0 0
        %649 = vmatpush1.bf16.msra.mxu0 0
        %650 = vmatprep.subr.bf16.mxu0 0
        %651 = vmatpush1.bf16.msra.mxu0 0
        %652 = vmatprep.subr.bf16.mxu0 0
        %653 = vmatpush1.bf16.msra.mxu0 0
        %654 = vmatprep.subr.bf16.mxu0 0
        %655 = vmatpush1.bf16.msra.mxu0 0
        %656 = vmatprep.subr.bf16.mxu0 0
        %657 = vmatpush1.bf16.msra.mxu0 0
        %658 = vmatprep.subr.bf16.mxu0 0
        %659 = vmatpush1.bf16.msra.mxu0 0
        %660 = vmatprep.subr.bf16.mxu0 0
        %661 = vmatpush1.bf16.msra.mxu0 0
        %662 = vmatprep.subr.bf16.mxu0 0
        %663 = vmatpush1.bf16.msra.mxu0 0
        %664 = vmatprep.mubr.bf16.mxu0 0
        %665 = vmatmul.mubr.bf16.gmra.mrb[0].mxu0 %v277
        %v666 = vpop.f32.mrb[0].mxu0
        %v667 = vadd.f32 %v623, %v666
        %v668 = vpop.f32.mrb[0].mxu0
        %v669 = vpop.f32.mrb[0].mxu0
        %v670 = vadd.f32 %v626, %v669
        %v671 = vpop.f32.mrb[0].mxu0
        %672 = vdwg.mxu0
        %s673 = scalar_lea.vmem %s1, 24
        %v674 = vld [vmem:[%s673] sm:$0xf]
        %v676 = vsel %vm279, %v674, 0
        %678 = vmatprep.subr.bf16.mxu0 0
        %679 = vmatpush1.bf16.msra.mxu0 %v676
        %680 = vmatprep.subr.bf16.mxu0 0
        %681 = vmatpush1.bf16.msra.mxu0 0
        %682 = vmatprep.subr.bf16.mxu0 0
        %683 = vmatpush1.bf16.msra.mxu0 0
        %684 = vmatprep.subr.bf16.mxu0 0
        %685 = vmatpush1.bf16.msra.mxu0 0
        %686 = vmatprep.subr.bf16.mxu0 0
        %687 = vmatpush1.bf16.msra.mxu0 0
        %688 = vmatprep.subr.bf16.mxu0 0
        %689 = vmatpush1.bf16.msra.mxu0 0
        %690 = vmatprep.subr.bf16.mxu0 0
        %691 = vmatpush1.bf16.msra.mxu0 0
        %692 = vmatprep.subr.bf16.mxu0 0
        %693 = vmatpush1.bf16.msra.mxu0 0
        %694 = vmatprep.subr.bf16.mxu0 0
        %695 = vmatpush1.bf16.msra.mxu0 0
        %696 = vmatprep.subr.bf16.mxu0 0
        %697 = vmatpush1.bf16.msra.mxu0 0
        %698 = vmatprep.subr.bf16.mxu0 0
        %699 = vmatpush1.bf16.msra.mxu0 0
        %700 = vmatprep.subr.bf16.mxu0 0
        %701 = vmatpush1.bf16.msra.mxu0 0
        %702 = vmatprep.subr.bf16.mxu0 0
        %703 = vmatpush1.bf16.msra.mxu0 0
        %704 = vmatprep.subr.bf16.mxu0 0
        %705 = vmatpush1.bf16.msra.mxu0 0
        %706 = vmatprep.subr.bf16.mxu0 0
        %707 = vmatpush1.bf16.msra.mxu0 0
        %708 = vmatprep.subr.bf16.mxu0 0
        %709 = vmatpush1.bf16.msra.mxu0 0
        %710 = vmatprep.mubr.bf16.mxu0 0
        %711 = vmatmul.mubr.bf16.gmra.mrb[0].mxu0 %v476
        %v712 = vpop.f32.mrb[0].mxu0
        %v713 = vadd.f32 0.0, %v712
        %v714 = vpop.f32.mrb[0].mxu0
        %v715 = vpop.f32.mrb[0].mxu0
        %v716 = vadd.f32 0.0, %v715
        %v717 = vpop.f32.mrb[0].mxu0
        %718 = vdwg.mxu0
        %v719 = vadd.f32 %v667, %v713
        %v720 = vadd.f32 %v670, %v716
        %v721 = vld [vmem:[%s379] sm:$0xe]
        %v722 = vld [vmem:[%s379 + $0x8] sm:$0xe]
        %v727 = vrot.slane %v721, 5
        %v728 = vrot.slane %v727, 4
        %v729 = vrot.slane %v439, 5
        %v730 = vsel %vm568, %v728, %v729
        %v731 = vrot.slane %v722, 5
        %v732 = vrot.slane %v731, 4
        %v733 = vrot.slane %v441, 5
        %v734 = vsel %vm568, %v732, %v733
        %s735 = scalar_lea.vmem %s1, 28
        %v736 = vld [vmem:[%s735] sm:$0xf]
        %v737 = vunpack.c.l.b16 %v730
        %v738 = vunpack.c.l.b16 %v734
        %v739 = vpack.c.b16 %v738, %v737
        %v741 = vsel %vm275, %v739, 0
        %v744 = vsel %vm279, %v736, 0
        %746 = vmatprep.subr.bf16.mxu0 0
        %747 = vmatpush1.bf16.msra.mxu0 %v744
        %748 = vmatprep.subr.bf16.mxu0 0
        %749 = vmatpush1.bf16.msra.mxu0 0
        %750 = vmatprep.subr.bf16.mxu0 0
        %751 = vmatpush1.bf16.msra.mxu0 0
        %752 = vmatprep.subr.bf16.mxu0 0
        %753 = vmatpush1.bf16.msra.mxu0 0
        %754 = vmatprep.subr.bf16.mxu0 0
        %755 = vmatpush1.bf16.msra.mxu0 0
        %756 = vmatprep.subr.bf16.mxu0 0
        %757 = vmatpush1.bf16.msra.mxu0 0
        %758 = vmatprep.subr.bf16.mxu0 0
        %759 = vmatpush1.bf16.msra.mxu0 0
        %760 = vmatprep.subr.bf16.mxu0 0
        %761 = vmatpush1.bf16.msra.mxu0 0
        %762 = vmatprep.subr.bf16.mxu0 0
        %763 = vmatpush1.bf16.msra.mxu0 0
        %764 = vmatprep.subr.bf16.mxu0 0
        %765 = vmatpush1.bf16.msra.mxu0 0
        %766 = vmatprep.subr.bf16.mxu0 0
        %767 = vmatpush1.bf16.msra.mxu0 0
        %768 = vmatprep.subr.bf16.mxu0 0
        %769 = vmatpush1.bf16.msra.mxu0 0
        %770 = vmatprep.subr.bf16.mxu0 0
        %771 = vmatpush1.bf16.msra.mxu0 0
        %772 = vmatprep.subr.bf16.mxu0 0
        %773 = vmatpush1.bf16.msra.mxu0 0
        %774 = vmatprep.subr.bf16.mxu0 0
        %775 = vmatpush1.bf16.msra.mxu0 0
        %776 = vmatprep.subr.bf16.mxu0 0
        %777 = vmatpush1.bf16.msra.mxu0 0
        %778 = vmatprep.mubr.bf16.mxu0 0
        %779 = vmatmul.mubr.bf16.gmra.mrb[0].mxu0 %v741
        %v780 = vpop.f32.mrb[0].mxu0
        %v781 = vadd.f32 0.0, %v780
        %v782 = vpop.f32.mrb[0].mxu0
        %v783 = vpop.f32.mrb[0].mxu0
        %v784 = vadd.f32 0.0, %v783
        %v785 = vpop.f32.mrb[0].mxu0
        %786 = vdwg.mxu0
        %v787 = vadd.f32 %v719, %v781
        %v788 = vadd.f32 %v720, %v784
        %v789 = vadd.f32 %v787, %v528
        %v790 = vadd.f32 %v788, %v528
        %v791 = vpack.c.bf16 %v790, %v789
        %v792 = vunpack.c.l.bf16 %v791
        %v793 = vunpack.c.h.bf16 %v791
        %v794 = vsel %vm535, %v792, 0.0
        %v795 = vsel %vm535, %v793, 0.0
        %v796 = vadd.f32 %v794, %v795
        %v797 = vrot.slane %v796, 4
        %v798 = vadd.f32 %v796, %v797
        %v799 = vrot.slane %v798, 2
        %v800 = vadd.f32 %v798, %v799
        %v801 = vrot.slane %v800, 1
        %v802 = vadd.f32 %v800, %v801
        %v803 = vadd.f32 %v545, %v802
        %v804 = vmul.f32 %v792, %v792
        %v805 = vmul.f32 %v793, %v793
        %v806 = vsel %vm535, %v804, 0.0
        %v807 = vsel %vm535, %v805, 0.0
        %v808 = vadd.f32 %v806, %v807
        %v809 = vrot.slane %v808, 4
        %v810 = vadd.f32 %v808, %v809
        %v811 = vrot.slane %v810, 2
        %v812 = vadd.f32 %v810, %v811
        %v813 = vrot.slane %v812, 1
        %v814 = vadd.f32 %v812, %v813
        %v815 = vadd.f32 %v557, %v814
        %s816 = scalar_lea.vmem %s1, 32
        %v817 = vld [vmem:[%s816] sm:$0xf]
        %s818 = scalar_lea.vmem %s1, 36
        %v819 = vld [vmem:[%s818] sm:$0xf]
        %v821 = vsel %vm279, %v819, 0
        %823 = vmatprep.subr.bf16.mxu0 0
        %824 = vmatpush1.bf16.msra.mxu0 %v821
        %825 = vmatprep.subr.bf16.mxu0 0
        %826 = vmatpush1.bf16.msra.mxu0 0
        %827 = vmatprep.subr.bf16.mxu0 0
        %828 = vmatpush1.bf16.msra.mxu0 0
        %829 = vmatprep.subr.bf16.mxu0 0
        %830 = vmatpush1.bf16.msra.mxu0 0
        %831 = vmatprep.subr.bf16.mxu0 0
        %832 = vmatpush1.bf16.msra.mxu0 0
        %833 = vmatprep.subr.bf16.mxu0 0
        %834 = vmatpush1.bf16.msra.mxu0 0
        %835 = vmatprep.subr.bf16.mxu0 0
        %836 = vmatpush1.bf16.msra.mxu0 0
        %837 = vmatprep.subr.bf16.mxu0 0
        %838 = vmatpush1.bf16.msra.mxu0 0
        %839 = vmatprep.subr.bf16.mxu0 0
        %840 = vmatpush1.bf16.msra.mxu0 0
        %841 = vmatprep.subr.bf16.mxu0 0
        %842 = vmatpush1.bf16.msra.mxu0 0
        %843 = vmatprep.subr.bf16.mxu0 0
        %844 = vmatpush1.bf16.msra.mxu0 0
        %845 = vmatprep.subr.bf16.mxu0 0
        %846 = vmatpush1.bf16.msra.mxu0 0
        %847 = vmatprep.subr.bf16.mxu0 0
        %848 = vmatpush1.bf16.msra.mxu0 0
        %849 = vmatprep.subr.bf16.mxu0 0
        %850 = vmatpush1.bf16.msra.mxu0 0
        %851 = vmatprep.subr.bf16.mxu0 0
        %852 = vmatpush1.bf16.msra.mxu0 0
        %853 = vmatprep.subr.bf16.mxu0 0
        %854 = vmatpush1.bf16.msra.mxu0 0
        %855 = vmatprep.mubr.bf16.mxu0 0
        %856 = vmatmul.mubr.bf16.gmra.mrb[0].mxu0 %v476
        %v857 = vpop.f32.mrb[0].mxu0
        %v858 = vadd.f32 0.0, %v857
        %v859 = vpop.f32.mrb[0].mxu0
        %v860 = vpop.f32.mrb[0].mxu0
        %v861 = vadd.f32 0.0, %v860
        %v862 = vpop.f32.mrb[0].mxu0
        %863 = vdwg.mxu0
        %v865 = vsel %vm279, %v817, 0
        %867 = vmatprep.subr.bf16.mxu0 0
        %868 = vmatpush1.bf16.msra.mxu0 %v865
        %869 = vmatprep.subr.bf16.mxu0 0
        %870 = vmatpush1.bf16.msra.mxu0 0
        %871 = vmatprep.subr.bf16.mxu0 0
        %872 = vmatpush1.bf16.msra.mxu0 0
        %873 = vmatprep.subr.bf16.mxu0 0
        %874 = vmatpush1.bf16.msra.mxu0 0
        %875 = vmatprep.subr.bf16.mxu0 0
        %876 = vmatpush1.bf16.msra.mxu0 0
        %877 = vmatprep.subr.bf16.mxu0 0
        %878 = vmatpush1.bf16.msra.mxu0 0
        %879 = vmatprep.subr.bf16.mxu0 0
        %880 = vmatpush1.bf16.msra.mxu0 0
        %881 = vmatprep.subr.bf16.mxu0 0
        %882 = vmatpush1.bf16.msra.mxu0 0
        %883 = vmatprep.subr.bf16.mxu0 0
        %884 = vmatpush1.bf16.msra.mxu0 0
        %885 = vmatprep.subr.bf16.mxu0 0
        %886 = vmatpush1.bf16.msra.mxu0 0
        %887 = vmatprep.subr.bf16.mxu0 0
        %888 = vmatpush1.bf16.msra.mxu0 0
        %889 = vmatprep.subr.bf16.mxu0 0
        %890 = vmatpush1.bf16.msra.mxu0 0
        %891 = vmatprep.subr.bf16.mxu0 0
        %892 = vmatpush1.bf16.msra.mxu0 0
        %893 = vmatprep.subr.bf16.mxu0 0
        %894 = vmatpush1.bf16.msra.mxu0 0
        %895 = vmatprep.subr.bf16.mxu0 0
        %896 = vmatpush1.bf16.msra.mxu0 0
        %897 = vmatprep.subr.bf16.mxu0 0
        %898 = vmatpush1.bf16.msra.mxu0 0
        %899 = vmatprep.mubr.bf16.mxu0 0
        %900 = vmatmul.mubr.bf16.gmra.mrb[0].mxu0 %v390
        %v901 = vpop.f32.mrb[0].mxu0
        %v902 = vadd.f32 %v858, %v901
        %v903 = vpop.f32.mrb[0].mxu0
        %v904 = vpop.f32.mrb[0].mxu0
        %v905 = vadd.f32 %v861, %v904
        %v906 = vpop.f32.mrb[0].mxu0
        %907 = vdwg.mxu0
        %s908 = sadd.s32 %s229, 2
        %s909 = smul.u32 %s908, 2
        %s910 = smul.addr %s909, 4
        %s911 = scalar_lea.vmem %s218, %s910
        %v912 = vld [vmem:[%s911] sm:$0xf]
        %v913 = vld [vmem:[%s911 + $0x8] sm:$0xf]
        %s914 = scalar_lea.vmem %s1, 40
        %v915 = vld [vmem:[%s914] sm:$0xf]
        %v918 = vunpack.c.l.b16 %v912
        %v919 = vunpack.c.l.b16 %v913
        %v920 = vpack.c.b16 %v919, %v918
        %v922 = vsel %vm275, %v920, 0
        %v925 = vsel %vm279, %v915, 0
        %927 = vmatprep.subr.bf16.mxu0 0
        %928 = vmatpush1.bf16.msra.mxu0 %v925
        %929 = vmatprep.subr.bf16.mxu0 0
        %930 = vmatpush1.bf16.msra.mxu0 0
        %931 = vmatprep.subr.bf16.mxu0 0
        %932 = vmatpush1.bf16.msra.mxu0 0
        %933 = vmatprep.subr.bf16.mxu0 0
        %934 = vmatpush1.bf16.msra.mxu0 0
        %935 = vmatprep.subr.bf16.mxu0 0
        %936 = vmatpush1.bf16.msra.mxu0 0
        %937 = vmatprep.subr.bf16.mxu0 0
        %938 = vmatpush1.bf16.msra.mxu0 0
        %939 = vmatprep.subr.bf16.mxu0 0
        %940 = vmatpush1.bf16.msra.mxu0 0
        %941 = vmatprep.subr.bf16.mxu0 0
        %942 = vmatpush1.bf16.msra.mxu0 0
        %943 = vmatprep.subr.bf16.mxu0 0
        %944 = vmatpush1.bf16.msra.mxu0 0
        %945 = vmatprep.subr.bf16.mxu0 0
        %946 = vmatpush1.bf16.msra.mxu0 0
        %947 = vmatprep.subr.bf16.mxu0 0
        %948 = vmatpush1.bf16.msra.mxu0 0
        %949 = vmatprep.subr.bf16.mxu0 0
        %950 = vmatpush1.bf16.msra.mxu0 0
        %951 = vmatprep.subr.bf16.mxu0 0
        %952 = vmatpush1.bf16.msra.mxu0 0
        %953 = vmatprep.subr.bf16.mxu0 0
        %954 = vmatpush1.bf16.msra.mxu0 0
        %955 = vmatprep.subr.bf16.mxu0 0
        %956 = vmatpush1.bf16.msra.mxu0 0
        %957 = vmatprep.subr.bf16.mxu0 0
        %958 = vmatpush1.bf16.msra.mxu0 0
        %959 = vmatprep.mubr.bf16.mxu0 0
        %960 = vmatmul.mubr.bf16.gmra.mrb[0].mxu0 %v922
        %v961 = vpop.f32.mrb[0].mxu0
        %v962 = vadd.f32 0.0, %v961
        %v963 = vpop.f32.mrb[0].mxu0
        %v964 = vpop.f32.mrb[0].mxu0
        %v965 = vadd.f32 0.0, %v964
        %v966 = vpop.f32.mrb[0].mxu0
        %967 = vdwg.mxu0
        %v968 = vadd.f32 %v902, %v962
        %v969 = vadd.f32 %v905, %v965
        %v970 = vld [vmem:[%s911] sm:$0xf]
        %v971 = vld [vmem:[%s911 + $0x4] sm:$0x1]
        %v972 = vld [vmem:[%s911 + $0x8] sm:$0xf]
        %v973 = vld [vmem:[%s911 + $0xc] sm:$0x1]
        %v975 = vshrl.u32 %v970, 16
        %v977 = vrot.slane %v975, 4
        %v978 = vshll.u32 %v970, 16
        %v980 = vrot.slane %v978, 5
        %v981 = vor.u32 %v977, %v980
        %v982 = vrot.slane %v981, 4
        %v984 = vshll.u32 %v971, 16
        %v986 = vrot.slane %v984, 5
        %v987 = vsel %vm241, %v982, %v986
        %v989 = vshrl.u32 %v972, 16
        %v991 = vrot.slane %v989, 4
        %v992 = vshll.u32 %v972, 16
        %v994 = vrot.slane %v992, 5
        %v995 = vor.u32 %v991, %v994
        %v996 = vrot.slane %v995, 4
        %v998 = vshll.u32 %v973, 16
        %v1000 = vrot.slane %v998, 5
        %v1001 = vsel %vm241, %v996, %v1000
        %s1002 = scalar_lea.vmem %s1, 44
        %v1003 = vld [vmem:[%s1002] sm:$0xf]
        %v1004 = vunpack.c.l.b16 %v987
        %v1005 = vunpack.c.l.b16 %v1001
        %v1006 = vpack.c.b16 %v1005, %v1004
        %v1008 = vsel %vm275, %v1006, 0
        %v1011 = vsel %vm279, %v1003, 0
        %1013 = vmatprep.subr.bf16.mxu0 0
        %1014 = vmatpush1.bf16.msra.mxu0 %v1011
        %1015 = vmatprep.subr.bf16.mxu0 0
        %1016 = vmatpush1.bf16.msra.mxu0 0
        %1017 = vmatprep.subr.bf16.mxu0 0
        %1018 = vmatpush1.bf16.msra.mxu0 0
        %1019 = vmatprep.subr.bf16.mxu0 0
        %1020 = vmatpush1.bf16.msra.mxu0 0
        %1021 = vmatprep.subr.bf16.mxu0 0
        %1022 = vmatpush1.bf16.msra.mxu0 0
        %1023 = vmatprep.subr.bf16.mxu0 0
        %1024 = vmatpush1.bf16.msra.mxu0 0
        %1025 = vmatprep.subr.bf16.mxu0 0
        %1026 = vmatpush1.bf16.msra.mxu0 0
        %1027 = vmatprep.subr.bf16.mxu0 0
        %1028 = vmatpush1.bf16.msra.mxu0 0
        %1029 = vmatprep.subr.bf16.mxu0 0
        %1030 = vmatpush1.bf16.msra.mxu0 0
        %1031 = vmatprep.subr.bf16.mxu0 0
        %1032 = vmatpush1.bf16.msra.mxu0 0
        %1033 = vmatprep.subr.bf16.mxu0 0
        %1034 = vmatpush1.bf16.msra.mxu0 0
        %1035 = vmatprep.subr.bf16.mxu0 0
        %1036 = vmatpush1.bf16.msra.mxu0 0
        %1037 = vmatprep.subr.bf16.mxu0 0
        %1038 = vmatpush1.bf16.msra.mxu0 0
        %1039 = vmatprep.subr.bf16.mxu0 0
        %1040 = vmatpush1.bf16.msra.mxu0 0
        %1041 = vmatprep.subr.bf16.mxu0 0
        %1042 = vmatpush1.bf16.msra.mxu0 0
        %1043 = vmatprep.subr.bf16.mxu0 0
        %1044 = vmatpush1.bf16.msra.mxu0 0
        %1045 = vmatprep.mubr.bf16.mxu0 0
        %1046 = vmatmul.mubr.bf16.gmra.mrb[0].mxu0 %v1008
        %v1047 = vpop.f32.mrb[0].mxu0
        %v1048 = vadd.f32 0.0, %v1047
        %v1049 = vpop.f32.mrb[0].mxu0
        %v1050 = vpop.f32.mrb[0].mxu0
        %v1051 = vadd.f32 0.0, %v1050
        %v1052 = vpop.f32.mrb[0].mxu0
        %1053 = vdwg.mxu0
        %v1054 = vadd.f32 %v968, %v1048
        %v1055 = vadd.f32 %v969, %v1051
        %v1056 = vadd.f32 %v1054, %v528
        %v1057 = vadd.f32 %v1055, %v528
        %v1058 = vpack.c.bf16 %v1057, %v1056
        %v1059 = vunpack.c.l.bf16 %v1058
        %v1060 = vunpack.c.h.bf16 %v1058
        %v1061 = vsel %vm535, %v1059, 0.0
        %v1062 = vsel %vm535, %v1060, 0.0
        %v1063 = vadd.f32 %v1061, %v1062
        %v1064 = vrot.slane %v1063, 4
        %v1065 = vadd.f32 %v1063, %v1064
        %v1066 = vrot.slane %v1065, 2
        %v1067 = vadd.f32 %v1065, %v1066
        %v1068 = vrot.slane %v1067, 1
        %v1069 = vadd.f32 %v1067, %v1068
        %v1070 = vadd.f32 %v803, %v1069
        %v1071 = vmul.f32 %v1059, %v1059
        %v1072 = vmul.f32 %v1060, %v1060
        %v1073 = vsel %vm535, %v1071, 0.0
        %v1074 = vsel %vm535, %v1072, 0.0
        %v1075 = vadd.f32 %v1073, %v1074
        %v1076 = vrot.slane %v1075, 4
        %v1077 = vadd.f32 %v1075, %v1076
        %v1078 = vrot.slane %v1077, 2
        %v1079 = vadd.f32 %v1077, %v1078
        %v1080 = vrot.slane %v1079, 1
        %v1081 = vadd.f32 %v1079, %v1080
        %v1082 = vadd.f32 %v815, %v1081
        %s1083 = scalar_lea.vmem %s1, 48
        %v1084 = vld [vmem:[%s1083] sm:$0xf]
        %s1085 = scalar_lea.vmem %s1, 52
        %v1086 = vld [vmem:[%s1085] sm:$0xf]
        %v1088 = vsel %vm279, %v1086, 0
        %1090 = vmatprep.subr.bf16.mxu0 0
        %1091 = vmatpush1.bf16.msra.mxu0 %v1088
        %1092 = vmatprep.subr.bf16.mxu0 0
        %1093 = vmatpush1.bf16.msra.mxu0 0
        %1094 = vmatprep.subr.bf16.mxu0 0
        %1095 = vmatpush1.bf16.msra.mxu0 0
        %1096 = vmatprep.subr.bf16.mxu0 0
        %1097 = vmatpush1.bf16.msra.mxu0 0
        %1098 = vmatprep.subr.bf16.mxu0 0
        %1099 = vmatpush1.bf16.msra.mxu0 0
        %1100 = vmatprep.subr.bf16.mxu0 0
        %1101 = vmatpush1.bf16.msra.mxu0 0
        %1102 = vmatprep.subr.bf16.mxu0 0
        %1103 = vmatpush1.bf16.msra.mxu0 0
        %1104 = vmatprep.subr.bf16.mxu0 0
        %1105 = vmatpush1.bf16.msra.mxu0 0
        %1106 = vmatprep.subr.bf16.mxu0 0
        %1107 = vmatpush1.bf16.msra.mxu0 0
        %1108 = vmatprep.subr.bf16.mxu0 0
        %1109 = vmatpush1.bf16.msra.mxu0 0
        %1110 = vmatprep.subr.bf16.mxu0 0
        %1111 = vmatpush1.bf16.msra.mxu0 0
        %1112 = vmatprep.subr.bf16.mxu0 0
        %1113 = vmatpush1.bf16.msra.mxu0 0
        %1114 = vmatprep.subr.bf16.mxu0 0
        %1115 = vmatpush1.bf16.msra.mxu0 0
        %1116 = vmatprep.subr.bf16.mxu0 0
        %1117 = vmatpush1.bf16.msra.mxu0 0
        %1118 = vmatprep.subr.bf16.mxu0 0
        %1119 = vmatpush1.bf16.msra.mxu0 0
        %1120 = vmatprep.subr.bf16.mxu0 0
        %1121 = vmatpush1.bf16.msra.mxu0 0
        %1122 = vmatprep.mubr.bf16.mxu0 0
        %1123 = vmatmul.mubr.bf16.gmra.mrb[0].mxu0 %v741
        %v1124 = vpop.f32.mrb[0].mxu0
        %v1125 = vadd.f32 0.0, %v1124
        %v1126 = vpop.f32.mrb[0].mxu0
        %v1127 = vpop.f32.mrb[0].mxu0
        %v1128 = vadd.f32 0.0, %v1127
        %v1129 = vpop.f32.mrb[0].mxu0
        %1130 = vdwg.mxu0
        %v1132 = vsel %vm279, %v1084, 0
        %1134 = vmatprep.subr.bf16.mxu0 0
        %1135 = vmatpush1.bf16.msra.mxu0 %v1132
        %1136 = vmatprep.subr.bf16.mxu0 0
        %1137 = vmatpush1.bf16.msra.mxu0 0
        %1138 = vmatprep.subr.bf16.mxu0 0
        %1139 = vmatpush1.bf16.msra.mxu0 0
        %1140 = vmatprep.subr.bf16.mxu0 0
        %1141 = vmatpush1.bf16.msra.mxu0 0
        %1142 = vmatprep.subr.bf16.mxu0 0
        %1143 = vmatpush1.bf16.msra.mxu0 0
        %1144 = vmatprep.subr.bf16.mxu0 0
        %1145 = vmatpush1.bf16.msra.mxu0 0
        %1146 = vmatprep.subr.bf16.mxu0 0
        %1147 = vmatpush1.bf16.msra.mxu0 0
        %1148 = vmatprep.subr.bf16.mxu0 0
        %1149 = vmatpush1.bf16.msra.mxu0 0
        %1150 = vmatprep.subr.bf16.mxu0 0
        %1151 = vmatpush1.bf16.msra.mxu0 0
        %1152 = vmatprep.subr.bf16.mxu0 0
        %1153 = vmatpush1.bf16.msra.mxu0 0
        %1154 = vmatprep.subr.bf16.mxu0 0
        %1155 = vmatpush1.bf16.msra.mxu0 0
        %1156 = vmatprep.subr.bf16.mxu0 0
        %1157 = vmatpush1.bf16.msra.mxu0 0
        %1158 = vmatprep.subr.bf16.mxu0 0
        %1159 = vmatpush1.bf16.msra.mxu0 0
        %1160 = vmatprep.subr.bf16.mxu0 0
        %1161 = vmatpush1.bf16.msra.mxu0 0
        %1162 = vmatprep.subr.bf16.mxu0 0
        %1163 = vmatpush1.bf16.msra.mxu0 0
        %1164 = vmatprep.subr.bf16.mxu0 0
        %1165 = vmatpush1.bf16.msra.mxu0 0
        %1166 = vmatprep.mubr.bf16.mxu0 0
        %1167 = vmatmul.mubr.bf16.gmra.mrb[0].mxu0 %v476
        %v1168 = vpop.f32.mrb[0].mxu0
        %v1169 = vadd.f32 %v1125, %v1168
        %v1170 = vpop.f32.mrb[0].mxu0
        %v1171 = vpop.f32.mrb[0].mxu0
        %v1172 = vadd.f32 %v1128, %v1171
        %v1173 = vpop.f32.mrb[0].mxu0
        %1174 = vdwg.mxu0
        %s1175 = scalar_lea.vmem %s1, 56
        %v1176 = vld [vmem:[%s1175] sm:$0xf]
        %v1178 = vsel %vm279, %v1176, 0
        %1180 = vmatprep.subr.bf16.mxu0 0
        %1181 = vmatpush1.bf16.msra.mxu0 %v1178
        %1182 = vmatprep.subr.bf16.mxu0 0
        %1183 = vmatpush1.bf16.msra.mxu0 0
        %1184 = vmatprep.subr.bf16.mxu0 0
        %1185 = vmatpush1.bf16.msra.mxu0 0
        %1186 = vmatprep.subr.bf16.mxu0 0
        %1187 = vmatpush1.bf16.msra.mxu0 0
        %1188 = vmatprep.subr.bf16.mxu0 0
        %1189 = vmatpush1.bf16.msra.mxu0 0
        %1190 = vmatprep.subr.bf16.mxu0 0
        %1191 = vmatpush1.bf16.msra.mxu0 0
        %1192 = vmatprep.subr.bf16.mxu0 0
        %1193 = vmatpush1.bf16.msra.mxu0 0
        %1194 = vmatprep.subr.bf16.mxu0 0
        %1195 = vmatpush1.bf16.msra.mxu0 0
        %1196 = vmatprep.subr.bf16.mxu0 0
        %1197 = vmatpush1.bf16.msra.mxu0 0
        %1198 = vmatprep.subr.bf16.mxu0 0
        %1199 = vmatpush1.bf16.msra.mxu0 0
        %1200 = vmatprep.subr.bf16.mxu0 0
        %1201 = vmatpush1.bf16.msra.mxu0 0
        %1202 = vmatprep.subr.bf16.mxu0 0
        %1203 = vmatpush1.bf16.msra.mxu0 0
        %1204 = vmatprep.subr.bf16.mxu0 0
        %1205 = vmatpush1.bf16.msra.mxu0 0
        %1206 = vmatprep.subr.bf16.mxu0 0
        %1207 = vmatpush1.bf16.msra.mxu0 0
        %1208 = vmatprep.subr.bf16.mxu0 0
        %1209 = vmatpush1.bf16.msra.mxu0 0
        %1210 = vmatprep.subr.bf16.mxu0 0
        %1211 = vmatpush1.bf16.msra.mxu0 0
        %1212 = vmatprep.mubr.bf16.mxu0 0
        %1213 = vmatmul.mubr.bf16.gmra.mrb[0].mxu0 %v1008
        %v1214 = vpop.f32.mrb[0].mxu0
        %v1215 = vadd.f32 0.0, %v1214
        %v1216 = vpop.f32.mrb[0].mxu0
        %v1217 = vpop.f32.mrb[0].mxu0
        %v1218 = vadd.f32 0.0, %v1217
        %v1219 = vpop.f32.mrb[0].mxu0
        %1220 = vdwg.mxu0
        %v1221 = vadd.f32 %v1169, %v1215
        %v1222 = vadd.f32 %v1172, %v1218
        %v1223 = vld [vmem:[%s911] sm:$0xe]
        %v1224 = vld [vmem:[%s911 + $0x8] sm:$0xe]
        %v1229 = vrot.slane %v1223, 5
        %v1230 = vrot.slane %v1229, 4
        %v1231 = vrot.slane %v971, 5
        %v1232 = vsel %vm568, %v1230, %v1231
        %v1233 = vrot.slane %v1224, 5
        %v1234 = vrot.slane %v1233, 4
        %v1235 = vrot.slane %v973, 5
        %v1236 = vsel %vm568, %v1234, %v1235
        %s1237 = scalar_lea.vmem %s1, 60
        %v1238 = vld [vmem:[%s1237] sm:$0xf]
        %v1239 = vunpack.c.l.b16 %v1232
        %v1240 = vunpack.c.l.b16 %v1236
        %v1241 = vpack.c.b16 %v1240, %v1239
        %v1243 = vsel %vm275, %v1241, 0
        %v1246 = vsel %vm279, %v1238, 0
        %1248 = vmatprep.subr.bf16.mxu0 0
        %1249 = vmatpush1.bf16.msra.mxu0 %v1246
        %1250 = vmatprep.subr.bf16.mxu0 0
        %1251 = vmatpush1.bf16.msra.mxu0 0
        %1252 = vmatprep.subr.bf16.mxu0 0
        %1253 = vmatpush1.bf16.msra.mxu0 0
        %1254 = vmatprep.subr.bf16.mxu0 0
        %1255 = vmatpush1.bf16.msra.mxu0 0
        %1256 = vmatprep.subr.bf16.mxu0 0
        %1257 = vmatpush1.bf16.msra.mxu0 0
        %1258 = vmatprep.subr.bf16.mxu0 0
        %1259 = vmatpush1.bf16.msra.mxu0 0
        %1260 = vmatprep.subr.bf16.mxu0 0
        %1261 = vmatpush1.bf16.msra.mxu0 0
        %1262 = vmatprep.subr.bf16.mxu0 0
        %1263 = vmatpush1.bf16.msra.mxu0 0
        %1264 = vmatprep.subr.bf16.mxu0 0
        %1265 = vmatpush1.bf16.msra.mxu0 0
        %1266 = vmatprep.subr.bf16.mxu0 0
        %1267 = vmatpush1.bf16.msra.mxu0 0
        %1268 = vmatprep.subr.bf16.mxu0 0
        %1269 = vmatpush1.bf16.msra.mxu0 0
        %1270 = vmatprep.subr.bf16.mxu0 0
        %1271 = vmatpush1.bf16.msra.mxu0 0
        %1272 = vmatprep.subr.bf16.mxu0 0
        %1273 = vmatpush1.bf16.msra.mxu0 0
        %1274 = vmatprep.subr.bf16.mxu0 0
        %1275 = vmatpush1.bf16.msra.mxu0 0
        %1276 = vmatprep.subr.bf16.mxu0 0
        %1277 = vmatpush1.bf16.msra.mxu0 0
        %1278 = vmatprep.subr.bf16.mxu0 0
        %1279 = vmatpush1.bf16.msra.mxu0 0
        %1280 = vmatprep.mubr.bf16.mxu0 0
        %1281 = vmatmul.mubr.bf16.gmra.mrb[0].mxu0 %v1243
        %v1282 = vpop.f32.mrb[0].mxu0
        %v1283 = vadd.f32 0.0, %v1282
        %v1284 = vpop.f32.mrb[0].mxu0
        %v1285 = vpop.f32.mrb[0].mxu0
        %v1286 = vadd.f32 0.0, %v1285
        %v1287 = vpop.f32.mrb[0].mxu0
        %1288 = vdwg.mxu0
        %v1289 = vadd.f32 %v1221, %v1283
        %v1290 = vadd.f32 %v1222, %v1286
        %v1291 = vadd.f32 %v1289, %v528
        %v1292 = vadd.f32 %v1290, %v528
        %v1293 = vpack.c.bf16 %v1292, %v1291
        %v1294 = vunpack.c.l.bf16 %v1293
        %v1295 = vunpack.c.h.bf16 %v1293
        %v1296 = vsel %vm535, %v1294, 0.0
        %v1297 = vsel %vm535, %v1295, 0.0
        %v1298 = vadd.f32 %v1296, %v1297
        %v1299 = vrot.slane %v1298, 4
        %v1300 = vadd.f32 %v1298, %v1299
        %v1301 = vrot.slane %v1300, 2
        %v1302 = vadd.f32 %v1300, %v1301
        %v1303 = vrot.slane %v1302, 1
        %v1304 = vadd.f32 %v1302, %v1303
        %v1305 = vadd.f32 %v1070, %v1304
        %v1306 = vmul.f32 %v1294, %v1294
        %v1307 = vmul.f32 %v1295, %v1295
        %v1308 = vsel %vm535, %v1306, 0.0
        %v1309 = vsel %vm535, %v1307, 0.0
        %v1310 = vadd.f32 %v1308, %v1309
        %v1311 = vrot.slane %v1310, 4
        %v1312 = vadd.f32 %v1310, %v1311
        %v1313 = vrot.slane %v1312, 2
        %v1314 = vadd.f32 %v1312, %v1313
        %v1315 = vrot.slane %v1314, 1
        %v1316 = vadd.f32 %v1314, %v1315
        %v1317 = vadd.f32 %v1082, %v1316
        %v1319 = vunpack.c.l.b16 %v532
        %v1320 = vunpack.c.h.b16 %v532
        %v1321 = vpack.c.b16 %v1319, %v1319
        %v1322 = vpack.c.b16 %v1320, %v1320
        %v1326 = vunpack.c.l.b16 %v791
        %v1327 = vunpack.c.h.b16 %v791
        %v1328 = vpack.c.b16 %v1326, %v1326
        %v1329 = vpack.c.b16 %v1327, %v1327
        %v1333 = vunpack.c.l.b16 %v1058
        %v1334 = vunpack.c.h.b16 %v1058
        %v1335 = vpack.c.b16 %v1333, %v1333
        %v1336 = vpack.c.b16 %v1334, %v1334
        %v1340 = vunpack.c.l.b16 %v1293
        %v1341 = vunpack.c.h.b16 %v1293
        %v1342 = vpack.c.b16 %v1340, %v1340
        %v1343 = vpack.c.b16 %v1341, %v1341
        %vm1346 = vcmask 257024
        %1347 = vst.msk [vmem:[%s203] sm:$0xf] %vm1346, %v1321
        %1348 = vst.msk [vmem:[%s203 + $0x4] sm:$0xf] %vm1346, %v1322
        %1349 = vst.msk [vmem:[%s203 + $0x8] sm:$0xf] %vm1346, %v1328
        %1350 = vst.msk [vmem:[%s203 + $0xc] sm:$0xf] %vm1346, %v1329
        %1351 = vst.msk [vmem:[%s203 + $0x10] sm:$0xf] %vm1346, %v1335
        %1352 = vst.msk [vmem:[%s203 + $0x14] sm:$0xf] %vm1346, %v1336
        %1353 = vst.msk [vmem:[%s203 + $0x18] sm:$0xf] %vm1346, %v1342
        %1354 = vst.msk [vmem:[%s203 + $0x1c] sm:$0xf] %vm1346, %v1343
        %vm1355 = vcmask 1040384
        %v1356 = vsel %vm1355, %v1305, %v1317
        %vm1357 = vcmask 254976
        %1358 = vst.msk [vmem:[%s227] sm:$0x3] %vm1357, %v1356
        %s1359 = sand.u32 %s106, 1
        %s1360 = sand.u32 %s106, 1
        %s1361 = smul.addr %s1360, 32
        %s1362 = scalar_lea.vmem [#allocation2], %s1361
        %p1363 = scmp.lt.s32.totalorder %s20, 1
        %s1364 = scalar_select %p1363, %s20, 1
        %p1365 = scmp.lt.s32.totalorder %s21, 3
        %s1366 = scalar_select %p1365, %s21, 3
        %s1367 = smul.addr %s1364, 4
        %s1368 = sadd.s32 %s1366, %s1367
        %s1369 = smul.addr %s1368, 2
        %s1370 = scalar_lea.vmem %s4, %s1369
        // Predicated region
        $region33: #{upsample_convt.2} parent=31 // pred_check
          %p1371 = pneg %p116
        $region34: #{upsample_convt.2} parent=31 // pred_check_branch
          %1373 = sbr.rel (%p1371) target = $region36
        $region35: #{upsample_convt.2} parent=31 // pred_region
          %s1374 = smul.u32 2, %s21
          %s1375 = smul.addr %s20, 32
          %s1376 = sadd.s32 %s1374, %s1375
          %s1377 = smul.addr %s1376, 4
          %s1378 = scalar_lea.vmem %s3, %s1377
          // Predicated region
          $region37: #{upsample_convt.2} parent=35 // pred_check
            _
          $region38: #{upsample_convt.2} parent=35 // pred_check_branch
            %1380 = sbr.rel (0) target = $region40
          $region39: #{upsample_convt.2} parent=35 // pred_region
            // Predicated region
            $region41: #{upsample_convt.2} parent=39 // pred_check
              _
            $region42: #{upsample_convt.2} parent=39 // pred_check_branch
              %1382 = sbr.rel target = $region44
            $region43: #{upsample_convt.2} parent=39 // pred_region
              // Predicated region
              $region56: #{upsample_convt.2} parent=43 // pred_check
                _
              $region57: #{upsample_convt.2} parent=43 // pred_check_branch
                %1411 = sbr.rel (0) target = $region59
              $region58: #{upsample_convt.2} parent=43 // pred_region
                loop: start=0, step=1, limit=1
                $region60: #{upsample_convt.2} parent=58 // loop_pre_header
                  _
                $region61: #{upsample_convt.2} parent=58 // loop_header
                  %s1413 = sphi 0, %s1417
                  %p1414 = scmp.ge.s32.totalorder %s1413, 1
                  %s1418 = sphi %s1362, %s1362
                  %s1419 = sphi %s1378, %s1378
                $region62: #{upsample_convt.2} parent=58 // loop_header_branch
                  %1416 = sbr.rel (%p1414) target = $region66
                $region63: #{upsample_convt.2} parent=58 // loop_body
                  _
                $region64: #{upsample_convt.2} parent=58 // loop_footer
                  %s1417 = sadd.s32 1, %s1413
                $region65: #{upsample_convt.2} parent=58 // loop_footer_branch
                  %1412 = sbr.rel target = $region61
                $region66: #{upsample_convt.2} parent=58 // loop_exit
                  _
                loop: start=0, step=1, limit=1
                $region67: #{upsample_convt.2} parent=58 // loop_pre_header
                  _
                $region68: #{upsample_convt.2} parent=58 // loop_header
                  %s1422 = sphi 0, %s1426
                  %p1423 = scmp.ge.s32.totalorder %s1422, 1
                  %s1427 = sphi %s1362, %s1362
                  %s1428 = sphi %s1378, %s1378
                $region69: #{upsample_convt.2} parent=58 // loop_header_branch
                  %1425 = sbr.rel (%p1423) target = $region73
                $region70: #{upsample_convt.2} parent=58 // loop_body
                  %v1429 = vld [vmem:[%s1427] sm:$0xf]
                  %1430 = vst [vmem:[%s1428] sm:$0xf] %v1429
                  %v1431 = vld [vmem:[%s1427 + $0x4] sm:$0xf]
                  %1432 = vst [vmem:[%s1428 + $0x4] sm:$0xf] %v1431
                  %v1433 = vld [vmem:[%s1427 + $0x8] sm:$0xf]
                  %1434 = vst [vmem:[%s1428 + $0x20] sm:$0xf] %v1433
                  %v1435 = vld [vmem:[%s1427 + $0xc] sm:$0xf]
                  %1436 = vst [vmem:[%s1428 + $0x24] sm:$0xf] %v1435
                  %v1437 = vld [vmem:[%s1427 + $0x10] sm:$0xf]
                  %1438 = vst [vmem:[%s1428 + $0x40] sm:$0xf] %v1437
                  %v1439 = vld [vmem:[%s1427 + $0x14] sm:$0xf]
                  %1440 = vst [vmem:[%s1428 + $0x44] sm:$0xf] %v1439
                  %v1441 = vld [vmem:[%s1427 + $0x18] sm:$0xf]
                  %1442 = vst [vmem:[%s1428 + $0x60] sm:$0xf] %v1441
                  %v1443 = vld [vmem:[%s1427 + $0x1c] sm:$0xf]
                  %1444 = vst [vmem:[%s1428 + $0x64] sm:$0xf] %v1443
                $region71: #{upsample_convt.2} parent=58 // loop_footer
                  %s1426 = sadd.s32 1, %s1422
                $region72: #{upsample_convt.2} parent=58 // loop_footer_branch
                  %1421 = sbr.rel target = $region68
                $region73: #{upsample_convt.2} parent=58 // loop_exit
                  _
              $region59: #{upsample_convt.2} parent=43 // pred_fallthru
                _
            $region44: #{upsample_convt.2} parent=39 // pred_fallthru
              _
            // Predicated region
            $region45: #{upsample_convt.2} parent=39 // pred_check
              _
            $region46: #{upsample_convt.2} parent=39 // pred_check_branch
              %1384 = sbr.rel (0) target = $region48
            $region47: #{upsample_convt.2} parent=39 // pred_region
              loop: start=0, step=1, limit=1
              $region49: #{upsample_convt.2} parent=47 // loop_pre_header
                _
              $region50: #{upsample_convt.2} parent=47 // loop_header
                %s1387 = sphi 0, %s1391
                %p1388 = scmp.ge.s32.totalorder %s1387, 1
                %s1392 = sphi %s1362, %s1362
                %s1393 = sphi %s1378, %s1378
              $region51: #{upsample_convt.2} parent=47 // loop_header_branch
                %1390 = sbr.rel (%p1388) target = $region55
              $region52: #{upsample_convt.2} parent=47 // loop_body
                %v1394 = vld [vmem:[%s1392] sm:$0xf]
                %1395 = vst [vmem:[%s1393] sm:$0xf] %v1394
                %v1396 = vld [vmem:[%s1392 + $0x4] sm:$0xf]
                %1397 = vst [vmem:[%s1393 + $0x4] sm:$0xf] %v1396
                %v1398 = vld [vmem:[%s1392 + $0x8] sm:$0xf]
                %1399 = vst [vmem:[%s1393 + $0x20] sm:$0xf] %v1398
                %v1400 = vld [vmem:[%s1392 + $0xc] sm:$0xf]
                %1401 = vst [vmem:[%s1393 + $0x24] sm:$0xf] %v1400
                %v1402 = vld [vmem:[%s1392 + $0x10] sm:$0xf]
                %1403 = vst [vmem:[%s1393 + $0x40] sm:$0xf] %v1402
                %v1404 = vld [vmem:[%s1392 + $0x14] sm:$0xf]
                %1405 = vst [vmem:[%s1393 + $0x44] sm:$0xf] %v1404
                %v1406 = vld [vmem:[%s1392 + $0x18] sm:$0xf]
                %1407 = vst [vmem:[%s1393 + $0x60] sm:$0xf] %v1406
                %v1408 = vld [vmem:[%s1392 + $0x1c] sm:$0xf]
                %1409 = vst [vmem:[%s1393 + $0x64] sm:$0xf] %v1408
              $region53: #{upsample_convt.2} parent=47 // loop_footer
                %s1391 = sadd.s32 1, %s1387
              $region54: #{upsample_convt.2} parent=47 // loop_footer_branch
                %1386 = sbr.rel target = $region50
              $region55: #{upsample_convt.2} parent=47 // loop_exit
                _
            $region48: #{upsample_convt.2} parent=39 // pred_fallthru
              _
          $region40: #{upsample_convt.2} parent=35 // pred_fallthru
            _
          %1445 = vnop
        $region36: #{upsample_convt.2} parent=31 // pred_fallthru
          _
        // Predicated region
        $region74: #{upsample_convt.2} parent=31 // pred_check
          %p1446 = pneg %p144
        $region75: #{upsample_convt.2} parent=31 // pred_check_branch
          %1448 = sbr.rel (%p1446) target = $region77
        $region76: #{upsample_convt.2} parent=31 // pred_region
          _
        $region77: #{upsample_convt.2} parent=31 // pred_fallthru
          _
      $region32: #{upsample_convt.2} parent=5 // pred_fallthru
        _
      %p1449 = scmp.le.s32.totalorder 2, %s11
      // Predicated region
      $region78: #{upsample_convt.2} parent=5 // pred_check
        %p1450 = pneg %p1449
      $region79: #{upsample_convt.2} parent=5 // pred_check_branch
        %1452 = sbr.rel (%p1450) target = $region81
      $region80: #{upsample_convt.2} parent=5 // pred_region
        %s1453 = ssub.s32 %s11, 2
        // Predicated region
        $region82: #{upsample_convt.2} parent=80 // pred_check
          %p1454 = pneg %p122
        $region83: #{upsample_convt.2} parent=80 // pred_check_branch
          %1456 = sbr.rel (%p1454) target = $region85
        $region84: #{upsample_convt.2} parent=80 // pred_region
          %s1457 = sand.u32 %s107, 1
          %s1458 = sand.u32 %s107, 1
          %s1459 = smul.addr %s1458, 32
          %s1460 = scalar_lea.vmem [#allocation2], %s1459
        $region85: #{upsample_convt.2} parent=80 // pred_fallthru
          _
        // Predicated region
        $region86: #{upsample_convt.2} parent=80 // pred_check
          %p1461 = pneg %p150
        $region87: #{upsample_convt.2} parent=80 // pred_check_branch
          %1463 = sbr.rel (%p1461) target = $region89
        $region88: #{upsample_convt.2} parent=80 // pred_region
          %p1464 = scmp.lt.s32.totalorder %s22, 1
          %s1465 = scalar_select %p1464, %s22, 1
          %p1466 = scmp.lt.s32.totalorder %s23, 3
          %s1467 = scalar_select %p1466, %s23, 3
          %s1468 = smul.addr %s1465, 4
          %s1469 = sadd.s32 %s1467, %s1468
          %s1470 = smul.addr %s1469, 2
          %s1471 = scalar_lea.vmem %s4, %s1470
        $region89: #{upsample_convt.2} parent=80 // pred_fallthru
          _
      $region81: #{upsample_convt.2} parent=5 // pred_fallthru
        _
    $region6: #{upsample_convt.2} parent=1 // loop_footer
      %s15 = sadd.s32 1, %s11
    $region7: #{upsample_convt.2} parent=1 // loop_footer_branch
      %10 = sbr.rel target = $region3
    $region8: #{upsample_convt.2} parent=1 // loop_exit
      _

</llo_original>
